<compile_context>
chip_gen: v7x
topology: tpu7x:2x2x1
jax: 0.10.0
libtpu: 0.0.40
codegen_flags: <defaults>
</compile_context>

<pallas_src>
import math
import functools

import numpy as np
import jax
import jax.numpy as jnp
from jax.experimental import pallas as pl
from jax.experimental.pallas import tpu as pltpu


def _level_meta(T, H, W, lt, lh, lw):
    """Static per-level metadata: kernel volume + clipped valid window slices.

    Window slices are expressed in *unpadded* coordinates; `valid` is the
    number of non-padding elements in the window (0 => window is all padding).
    """
    tk = int(math.ceil(T / lt))
    hk = int(math.ceil(H / lh))
    wk = int(math.ceil(W / lw))
    tp1 = (tk * lt - T) // 2   # floor on the leading side (matches torch code)
    hp1 = (hk * lh - H) // 2
    wp1 = (wk * lw - W) // 2
    windows = []
    for it in range(lt):
        ts, te = it * tk - tp1, (it + 1) * tk - tp1
        cts, cte = max(ts, 0), min(te, T)
        for ih in range(lh):
            hs, he = ih * hk - hp1, (ih + 1) * hk - hp1
            chs, che = max(hs, 0), min(he, H)
            for iw in range(lw):
                ws, we = iw * wk - wp1, (iw + 1) * wk - wp1
                cws, cwe = max(ws, 0), min(we, W)
                valid = (max(cte - cts, 0) * max(che - chs, 0)
                         * max(cwe - cws, 0))
                windows.append((cts, cte, chs, che, cws, cwe, valid))
    return dict(k=tk * hk * wk, nwin=lt * lh * lw, windows=tuple(windows))


def _pyramid_pool_kernel(x_ref, *out_refs, mode, level_meta):
    """x_ref: [tileC, T, H, W] VMEM block (one batch element / C-tile).

    out_refs[lev]: [1, tileC, nwin_lev] pooled outputs for pyramid level lev.
    All pyramid levels are computed from the single resident input block.
    """
    tile_c = x_ref.shape[0]

    for lev, meta in enumerate(level_meta):
        inv_k = 1.0 / float(meta["k"])
        cols = []
        for (ts, te, hs, he, ws, we, valid) in meta["windows"]:
            if valid == 0:
                # Window lies entirely inside the zero padding -> pooled 0.
                cols.append(jnp.zeros((tile_c, 1), dtype=jnp.float32))
                continue
            if mode == "max":
                # Unrolled elementwise max over T (pure VPU, no XLU needed).
                acc = x_ref[:, ts, hs:he, ws:we]                 # [tileC, hh, ww]
                for t in range(ts + 1, te):
                    acc = jnp.maximum(acc, x_ref[:, t, hs:he, ws:we])
                r = jnp.max(acc, axis=1)                         # sublane (H)
                r = jnp.max(r, axis=-1, keepdims=True)           # short lane (W)
                if valid < meta["k"]:
                    # Zero padding participates in the max, exactly like
                    # F.pad(value=0) + nn.MaxPool3d in the reference module.
                    r = jnp.maximum(r, jnp.zeros((), dtype=r.dtype))
                cols.append(r.astype(jnp.float32))
            else:  # avg
                # Accumulate in f32 (bf16-safe; v5e has no bf16 VPU path).
                acc = x_ref[:, ts, hs:he, ws:we].astype(jnp.float32)
                for t in range(ts + 1, te):
                    acc = acc + x_ref[:, t, hs:he, ws:we].astype(jnp.float32)
                r = jnp.sum(acc, axis=1)
                r = jnp.sum(r, axis=-1, keepdims=True)
                # nn.AvgPool3d divides by the full kernel volume; padding zeros
                # contribute nothing to the sum, so sum(valid) * 1/K is exact.
                cols.append(r * inv_k)
        out = jnp.concatenate(cols, axis=-1) if len(cols) > 1 else cols[0]
        out_refs[lev][0] = out.astype(out_refs[lev].dtype)


def pyramid_pooling_3d(x, levels, mode="max", *,
                       c_block_budget_bytes=4 * 1024 * 1024):
    """Equivalent of PyramidPooling3D(levels, mode).forward(x).

    x: [B, C, T, H, W]; returns [B, sum_i C*lt_i*lh_i*lw_i].
    """
    assert mode in ("max", "avg")
    B, C, T, H, W = x.shape
    itemsize = jnp.dtype(x.dtype).itemsize
    per_c_bytes = T * H * W * itemsize

    # Largest divisor of C whose (tileC, T, H, W) block fits the VMEM budget
    # (keeps double-buffered input blocks comfortably inside v7x's 64 MiB).
    tile_c = 1
    for d in range(C, 0, -1):
        if C % d == 0 and d * per_c_bytes <= c_block_budget_bytes:
            tile_c = d
            break
    n_ct = C // tile_c
    n_blocks = B * n_ct

    metas = tuple(
        _level_meta(T, H, W,
                    int(levels[0][i]), int(levels[1][i]), int(levels[2][i]))
        for i in range(len(levels[0]))
    )

    # Free metadata reshape: [B, C, T, H, W] -> [B*C, T, H, W]; blocks of
    # tile_c rows never straddle a batch boundary since tile_c divides C.
    x_flat = x.reshape(B * C, T, H, W)

    out_shapes = tuple(
        jax.ShapeDtypeStruct((n_blocks, tile_c, m["nwin"]), x.dtype)
        for m in metas
    )
    out_specs = [
        pl.BlockSpec((1, tile_c, m["nwin"]), lambda g: (g, 0, 0))
        for m in metas
    ]
    in_specs = [pl.BlockSpec((tile_c, T, H, W), lambda g: (g, 0, 0, 0))]
    # TODO(synk): if DMA is still exposed for K-heavy level-1 blocks, raise
    # pipelining depth via pipeline_mode=pl.Buffered(3) on the input spec.

    block_bytes = tile_c * per_c_bytes
    vmem_limit = int(min(60 * 1024 * 1024,
                         max(16 * 1024 * 1024,
                             4 * block_bytes + 2 * 1024 * 1024)))

    outs = pl.pallas_call(
        functools.partial(_pyramid_pool_kernel, mode=mode, level_meta=metas),
        grid=(n_blocks,),
        in_specs=in_specs,
        out_specs=out_specs,
        out_shape=out_shapes,
        compiler_params=pltpu.CompilerParams(
            dimension_semantics=("parallel",),   # shard across 2 TCs on v7x
            vmem_limit_bytes=vmem_limit,
        ),
    )(x_flat)

    # [B*nct, tileC, nwin] flattens to C-major-then-window order per batch,
    # matching torch's pooled.view(B, -1); concat of the tiny per-level
    # vectors is negligible next to the single input HBM pass.
    return jnp.concatenate([o.reshape(B, -1) for o in outs], axis=1)


def _reference(x, levels, mode):
    """Pure-JAX reference (no Pallas) with identical semantics."""
    B, C, T, H, W = x.shape
    outs = []
    for i in range(len(levels[0])):
        lt, lh, lw = int(levels[0][i]), int(levels[1][i]), int(levels[2][i])
        tk = int(math.ceil(T / lt))
        hk = int(math.ceil(H / lh))
        wk = int(math.ceil(W / lw))
        tp, hp, wp = tk * lt - T, hk * lh - H, wk * lw - W
        xp = jnp.pad(
            x,
            ((0, 0), (0, 0), (tp // 2, tp - tp // 2),
             (hp // 2, hp - hp // 2), (wp // 2, wp - wp // 2)),
        )
        xr = xp.reshape(B, C, lt, tk, lh, hk, lw, wk)
        if mode == "max":
            pooled = jnp.max(xr, axis=(3, 5, 7))
        else:
            pooled = jnp.mean(xr, axis=(3, 5, 7))
        outs.append(pooled.reshape(B, -1))
    return jnp.concatenate(outs, axis=1)


if __name__ == "__main__":
    key = jax.random.PRNGKey(0)
    # Small, non-divisible spatial dims so the symmetric-padding path is hit.
    B, C, T, H, W = 2, 4, 6, 7, 9
    x = jax.random.normal(key, (B, C, T, H, W), dtype=jnp.float32)
    levels = [[1, 2, 3], [1, 2, 3], [1, 2, 3]]

    ok = True
    for mode in ("max", "avg"):
        out = jax.block_until_ready(pyramid_pooling_3d(x, levels, mode=mode))
        ref = _reference(x, levels, mode)
        expected_n = sum(C * levels[0][i] * levels[1][i] * levels[2][i]
                         for i in range(len(levels[0])))
        ok &= out.shape == (B, expected_n)
        ok &= bool(np.allclose(np.asarray(out), np.asarray(ref),
                               rtol=1e-5, atol=1e-5))

    print("KERNEL_OK" if ok else "MISMATCH")
</pallas_src>

<mosaic_0001>
module attributes {stable_mosaic.version = 11 : i64} {
  func.func @_pyramid_pool_kernel(%arg0: i32, %arg1: memref<4x6x7x9xf32, #tpu.memory_space<vmem>>, %arg2: memref<1x4x1xf32, #tpu.memory_space<vmem>>, %arg3: memref<1x4x8xf32, #tpu.memory_space<vmem>>, %arg4: memref<1x4x27xf32, #tpu.memory_space<vmem>>) attributes {dimension_semantics = [#tpu.dimension_semantics<parallel>], iteration_bounds = array<i64: 2>, scalar_prefetch = 0 : i64, scratch_operands = 0 : i64, tpu.core_type = #tpu.core_type<tc>, window_params = [{transform_indices = @transform_0, window_bounds = array<i64: 4, 6, 7, 9>}, {transform_indices = @transform_1, window_bounds = array<i64: 1, 4, 1>}, {transform_indices = @transform_2, window_bounds = array<i64: 1, 4, 8>}, {transform_indices = @transform_3, window_bounds = array<i64: 1, 4, 27>}]} {
    %c0 = arith.constant 0 : index
    %c0_0 = arith.constant 0 : index
    %c0_1 = arith.constant 0 : index
    %c0_2 = arith.constant 0 : index
    %0 = vector.load %arg1[%c0, %c0_0, %c0_1, %c0_2] : memref<4x6x7x9xf32, #tpu.memory_space<vmem>>, vector<4x1x7x9xf32>
    %1 = vector.shape_cast %0 : vector<4x1x7x9xf32> to vector<4x7x9xf32>
    %c0_3 = arith.constant 0 : index
    %c1 = arith.constant 1 : index
    %c0_4 = arith.constant 0 : index
    %c0_5 = arith.constant 0 : index
    %2 = vector.load %arg1[%c0_3, %c1, %c0_4, %c0_5] : memref<4x6x7x9xf32, #tpu.memory_space<vmem>>, vector<4x1x7x9xf32>
    %3 = vector.shape_cast %2 : vector<4x1x7x9xf32> to vector<4x7x9xf32>
    %4 = arith.maximumf %1, %3 : vector<4x7x9xf32>
    %c0_6 = arith.constant 0 : index
    %c2 = arith.constant 2 : index
    %c0_7 = arith.constant 0 : index
    %c0_8 = arith.constant 0 : index
    %5 = vector.load %arg1[%c0_6, %c2, %c0_7, %c0_8] : memref<4x6x7x9xf32, #tpu.memory_space<vmem>>, vector<4x1x7x9xf32>
    %6 = vector.shape_cast %5 : vector<4x1x7x9xf32> to vector<4x7x9xf32>
    %7 = arith.maximumf %4, %6 : vector<4x7x9xf32>
    %c0_9 = arith.constant 0 : index
    %c3 = arith.constant 3 : index
    %c0_10 = arith.constant 0 : index
    %c0_11 = arith.constant 0 : index
    %8 = vector.load %arg1[%c0_9, %c3, %c0_10, %c0_11] : memref<4x6x7x9xf32, #tpu.memory_space<vmem>>, vector<4x1x7x9xf32>
    %9 = vector.shape_cast %8 : vector<4x1x7x9xf32> to vector<4x7x9xf32>
    %10 = arith.maximumf %7, %9 : vector<4x7x9xf32>
    %c0_12 = arith.constant 0 : index
    %c4 = arith.constant 4 : index
    %c0_13 = arith.constant 0 : index
    %c0_14 = arith.constant 0 : index
    %11 = vector.load %arg1[%c0_12, %c4, %c0_13, %c0_14] : memref<4x6x7x9xf32, #tpu.memory_space<vmem>>, vector<4x1x7x9xf32>
    %12 = vector.shape_cast %11 : vector<4x1x7x9xf32> to vector<4x7x9xf32>
    %13 = arith.maximumf %10, %12 : vector<4x7x9xf32>
    %c0_15 = arith.constant 0 : index
    %c5 = arith.constant 5 : index
    %c0_16 = arith.constant 0 : index
    %c0_17 = arith.constant 0 : index
    %14 = vector.load %arg1[%c0_15, %c5, %c0_16, %c0_17] : memref<4x6x7x9xf32, #tpu.memory_space<vmem>>, vector<4x1x7x9xf32>
    %15 = vector.shape_cast %14 : vector<4x1x7x9xf32> to vector<4x7x9xf32>
    %16 = arith.maximumf %13, %15 : vector<4x7x9xf32>
    %cst = arith.constant dense<0xFF800000> : vector<4x9xf32>
    %17 = vector.multi_reduction <maximumf>, %16, %cst [1] : vector<4x7x9xf32> to vector<4x9xf32>
    %cst_18 = arith.constant dense<0xFF800000> : vector<4xf32>
    %18 = vector.multi_reduction <maximumf>, %17, %cst_18 [1] : vector<4x9xf32> to vector<4xf32>
    %19 = vector.shape_cast %18 : vector<4xf32> to vector<4x1xf32>
    %c0_19 = arith.constant 0 : index
    %c0_20 = arith.constant 0 : index
    %c0_21 = arith.constant 0 : index
    %20 = vector.load %arg2[%c0_19, %c0_20, %c0_21] : memref<1x4x1xf32, #tpu.memory_space<vmem>>, vector<1x4x1xf32>
    %21 = vector.shape_cast %20 : vector<1x4x1xf32> to vector<4x1xf32>
    %22 = vector.shape_cast %19 : vector<4x1xf32> to vector<1x4x1xf32>
    tpu.vector_store %arg2[%c0_19, %c0_20, %c0_21], %22 {strides = array<i32>} : memref<1x4x1xf32, #tpu.memory_space<vmem>>, vector<1x4x1xf32>,
    %c0_22 = arith.constant 0 : index
    %c0_23 = arith.constant 0 : index
    %c0_24 = arith.constant 0 : index
    %c0_25 = arith.constant 0 : index
    %23 = vector.load %arg1[%c0_22, %c0_23, %c0_24, %c0_25] : memref<4x6x7x9xf32, #tpu.memory_space<vmem>>, vector<4x1x4x5xf32>
    %24 = vector.shape_cast %23 : vector<4x1x4x5xf32> to vector<4x4x5xf32>
    %c0_26 = arith.constant 0 : index
    %c1_27 = arith.constant 1 : index
    %c0_28 = arith.constant 0 : index
    %c0_29 = arith.constant 0 : index
    %25 = vector.load %arg1[%c0_26, %c1_27, %c0_28, %c0_29] : memref<4x6x7x9xf32, #tpu.memory_space<vmem>>, vector<4x1x4x5xf32>
    %26 = vector.shape_cast %25 : vector<4x1x4x5xf32> to vector<4x4x5xf32>
    %27 = arith.maximumf %24, %26 : vector<4x4x5xf32>
    %c0_30 = arith.constant 0 : index
    %c2_31 = arith.constant 2 : index
    %c0_32 = arith.constant 0 : index
    %c0_33 = arith.constant 0 : index
    %28 = vector.load %arg1[%c0_30, %c2_31, %c0_32, %c0_33] : memref<4x6x7x9xf32, #tpu.memory_space<vmem>>, vector<4x1x4x5xf32>
    %29 = vector.shape_cast %28 : vector<4x1x4x5xf32> to vector<4x4x5xf32>
    %30 = arith.maximumf %27, %29 : vector<4x4x5xf32>
    %cst_34 = arith.constant dense<0xFF800000> : vector<4x5xf32>
    %31 = vector.multi_reduction <maximumf>, %30, %cst_34 [1] : vector<4x4x5xf32> to vector<4x5xf32>
    %cst_35 = arith.constant dense<0xFF800000> : vector<4xf32>
    %32 = vector.multi_reduction <maximumf>, %31, %cst_35 [1] : vector<4x5xf32> to vector<4xf32>
    %33 = vector.shape_cast %32 : vector<4xf32> to vector<4x1xf32>
    %c0_36 = arith.constant 0 : index
    %c0_37 = arith.constant 0 : index
    %c0_38 = arith.constant 0 : index
    %c5_39 = arith.constant 5 : index
    %34 = vector.load %arg1[%c0_36, %c0_37, %c0_38, %c5_39] : memref<4x6x7x9xf32, #tpu.memory_space<vmem>>, vector<4x1x4x4xf32>
    %35 = vector.shape_cast %34 : vector<4x1x4x4xf32> to vector<4x4x4xf32>
    %c0_40 = arith.constant 0 : index
    %c1_41 = arith.constant 1 : index
    %c0_42 = arith.constant 0 : index
    %c5_43 = arith.constant 5 : index
    %36 = vector.load %arg1[%c0_40, %c1_41, %c0_42, %c5_43] : memref<4x6x7x9xf32, #tpu.memory_space<vmem>>, vector<4x1x4x4xf32>
    %37 = vector.shape_cast %36 : vector<4x1x4x4xf32> to vector<4x4x4xf32>
    %38 = arith.maximumf %35, %37 : vector<4x4x4xf32>
    %c0_44 = arith.constant 0 : index
    %c2_45 = arith.constant 2 : index
    %c0_46 = arith.constant 0 : index
    %c5_47 = arith.constant 5 : index
    %39 = vector.load %arg1[%c0_44, %c2_45, %c0_46, %c5_47] : memref<4x6x7x9xf32, #tpu.memory_space<vmem>>, vector<4x1x4x4xf32>
    %40 = vector.shape_cast %39 : vector<4x1x4x4xf32> to vector<4x4x4xf32>
    %41 = arith.maximumf %38, %40 : vector<4x4x4xf32>
    %cst_48 = arith.constant dense<0xFF800000> : vector<4x4xf32>
    %42 = vector.multi_reduction <maximumf>, %41, %cst_48 [1] : vector<4x4x4xf32> to vector<4x4xf32>
    %cst_49 = arith.constant dense<0xFF800000> : vector<4xf32>
    %43 = vector.multi_reduction <maximumf>, %42, %cst_49 [1] : vector<4x4xf32> to vector<4xf32>
    %44 = vector.shape_cast %43 : vector<4xf32> to vector<4x1xf32>
    %cst_50 = arith.constant 0.000000e+00 : f32
    %45 = vector.broadcast %cst_50 : f32 to vector<4x1xf32>
    %46 = arith.maximumf %44, %45 : vector<4x1xf32>
    %c0_51 = arith.constant 0 : index
    %c0_52 = arith.constant 0 : index
    %c4_53 = arith.constant 4 : index
    %c0_54 = arith.constant 0 : index
    %47 = vector.load %arg1[%c0_51, %c0_52, %c4_53, %c0_54] : memref<4x6x7x9xf32, #tpu.memory_space<vmem>>, vector<4x1x3x5xf32>
    %48 = vector.shape_cast %47 : vector<4x1x3x5xf32> to vector<4x3x5xf32>
    %c0_55 = arith.constant 0 : index
    %c1_56 = arith.constant 1 : index
    %c4_57 = arith.constant 4 : index
    %c0_58 = arith.constant 0 : index
    %49 = vector.load %arg1[%c0_55, %c1_56, %c4_57, %c0_58] : memref<4x6x7x9xf32, #tpu.memory_space<vmem>>, vector<4x1x3x5xf32>
    %50 = vector.shape_cast %49 : vector<4x1x3x5xf32> to vector<4x3x5xf32>
    %51 = arith.maximumf %48, %50 : vector<4x3x5xf32>
    %c0_59 = arith.constant 0 : index
    %c2_60 = arith.constant 2 : index
    %c4_61 = arith.constant 4 : index
    %c0_62 = arith.constant 0 : index
    %52 = vector.load %arg1[%c0_59, %c2_60, %c4_61, %c0_62] : memref<4x6x7x9xf32, #tpu.memory_space<vmem>>, vector<4x1x3x5xf32>
    %53 = vector.shape_cast %52 : vector<4x1x3x5xf32> to vector<4x3x5xf32>
    %54 = arith.maximumf %51, %53 : vector<4x3x5xf32>
    %cst_63 = arith.constant dense<0xFF800000> : vector<4x5xf32>
    %55 = vector.multi_reduction <maximumf>, %54, %cst_63 [1] : vector<4x3x5xf32> to vector<4x5xf32>
    %cst_64 = arith.constant dense<0xFF800000> : vector<4xf32>
    %56 = vector.multi_reduction <maximumf>, %55, %cst_64 [1] : vector<4x5xf32> to vector<4xf32>
    %57 = vector.shape_cast %56 : vector<4xf32> to vector<4x1xf32>
    %cst_65 = arith.constant 0.000000e+00 : f32
    %58 = vector.broadcast %cst_65 : f32 to vector<4x1xf32>
    %59 = arith.maximumf %57, %58 : vector<4x1xf32>
    %c0_66 = arith.constant 0 : index
    %c0_67 = arith.constant 0 : index
    %c4_68 = arith.constant 4 : index
    %c5_69 = arith.constant 5 : index
    %60 = vector.load %arg1[%c0_66, %c0_67, %c4_68, %c5_69] : memref<4x6x7x9xf32, #tpu.memory_space<vmem>>, vector<4x1x3x4xf32>
    %61 = vector.shape_cast %60 : vector<4x1x3x4xf32> to vector<4x3x4xf32>
    %c0_70 = arith.constant 0 : index
    %c1_71 = arith.constant 1 : index
    %c4_72 = arith.constant 4 : index
    %c5_73 = arith.constant 5 : index
    %62 = vector.load %arg1[%c0_70, %c1_71, %c4_72, %c5_73] : memref<4x6x7x9xf32, #tpu.memory_space<vmem>>, vector<4x1x3x4xf32>
    %63 = vector.shape_cast %62 : vector<4x1x3x4xf32> to vector<4x3x4xf32>
    %64 = arith.maximumf %61, %63 : vector<4x3x4xf32>
    %c0_74 = arith.constant 0 : index
    %c2_75 = arith.constant 2 : index
    %c4_76 = arith.constant 4 : index
    %c5_77 = arith.constant 5 : index
    %65 = vector.load %arg1[%c0_74, %c2_75, %c4_76, %c5_77] : memref<4x6x7x9xf32, #tpu.memory_space<vmem>>, vector<4x1x3x4xf32>
    %66 = vector.shape_cast %65 : vector<4x1x3x4xf32> to vector<4x3x4xf32>
    %67 = arith.maximumf %64, %66 : vector<4x3x4xf32>
    %cst_78 = arith.constant dense<0xFF800000> : vector<4x4xf32>
    %68 = vector.multi_reduction <maximumf>, %67, %cst_78 [1] : vector<4x3x4xf32> to vector<4x4xf32>
    %cst_79 = arith.constant dense<0xFF800000> : vector<4xf32>
    %69 = vector.multi_reduction <maximumf>, %68, %cst_79 [1] : vector<4x4xf32> to vector<4xf32>
    %70 = vector.shape_cast %69 : vector<4xf32> to vector<4x1xf32>
    %cst_80 = arith.constant 0.000000e+00 : f32
    %71 = vector.broadcast %cst_80 : f32 to vector<4x1xf32>
    %72 = arith.maximumf %70, %71 : vector<4x1xf32>
    %c0_81 = arith.constant 0 : index
    %c3_82 = arith.constant 3 : index
    %c0_83 = arith.constant 0 : index
    %c0_84 = arith.constant 0 : index
    %73 = vector.load %arg1[%c0_81, %c3_82, %c0_83, %c0_84] : memref<4x6x7x9xf32, #tpu.memory_space<vmem>>, vector<4x1x4x5xf32>
    %74 = vector.shape_cast %73 : vector<4x1x4x5xf32> to vector<4x4x5xf32>
    %c0_85 = arith.constant 0 : index
    %c4_86 = arith.constant 4 : index
    %c0_87 = arith.constant 0 : index
    %c0_88 = arith.constant 0 : index
    %75 = vector.load %arg1[%c0_85, %c4_86, %c0_87, %c0_88] : memref<4x6x7x9xf32, #tpu.memory_space<vmem>>, vector<4x1x4x5xf32>
    %76 = vector.shape_cast %75 : vector<4x1x4x5xf32> to vector<4x4x5xf32>
    %77 = arith.maximumf %74, %76 : vector<4x4x5xf32>
    %c0_89 = arith.constant 0 : index
    %c5_90 = arith.constant 5 : index
    %c0_91 = arith.constant 0 : index
    %c0_92 = arith.constant 0 : index
    %78 = vector.load %arg1[%c0_89, %c5_90, %c0_91, %c0_92] : memref<4x6x7x9xf32, #tpu.memory_space<vmem>>, vector<4x1x4x5xf32>
    %79 = vector.shape_cast %78 : vector<4x1x4x5xf32> to vector<4x4x5xf32>
    %80 = arith.maximumf %77, %79 : vector<4x4x5xf32>
    %cst_93 = arith.constant dense<0xFF800000> : vector<4x5xf32>
    %81 = vector.multi_reduction <maximumf>, %80, %cst_93 [1] : vector<4x4x5xf32> to vector<4x5xf32>
    %cst_94 = arith.constant dense<0xFF800000> : vector<4xf32>
    %82 = vector.multi_reduction <maximumf>, %81, %cst_94 [1] : vector<4x5xf32> to vector<4xf32>
    %83 = vector.shape_cast %82 : vector<4xf32> to vector<4x1xf32>
    %c0_95 = arith.constant 0 : index
    %c3_96 = arith.constant 3 : index
    %c0_97 = arith.constant 0 : index
    %c5_98 = arith.constant 5 : index
    %84 = vector.load %arg1[%c0_95, %c3_96, %c0_97, %c5_98] : memref<4x6x7x9xf32, #tpu.memory_space<vmem>>, vector<4x1x4x4xf32>
    %85 = vector.shape_cast %84 : vector<4x1x4x4xf32> to vector<4x4x4xf32>
    %c0_99 = arith.constant 0 : index
    %c4_100 = arith.constant 4 : index
    %c0_101 = arith.constant 0 : index
    %c5_102 = arith.constant 5 : index
    %86 = vector.load %arg1[%c0_99, %c4_100, %c0_101, %c5_102] : memref<4x6x7x9xf32, #tpu.memory_space<vmem>>, vector<4x1x4x4xf32>
    %87 = vector.shape_cast %86 : vector<4x1x4x4xf32> to vector<4x4x4xf32>
    %88 = arith.maximumf %85, %87 : vector<4x4x4xf32>
    %c0_103 = arith.constant 0 : index
    %c5_104 = arith.constant 5 : index
    %c0_105 = arith.constant 0 : index
    %c5_106 = arith.constant 5 : index
    %89 = vector.load %arg1[%c0_103, %c5_104, %c0_105, %c5_106] : memref<4x6x7x9xf32, #tpu.memory_space<vmem>>, vector<4x1x4x4xf32>
    %90 = vector.shape_cast %89 : vector<4x1x4x4xf32> to vector<4x4x4xf32>
    %91 = arith.maximumf %88, %90 : vector<4x4x4xf32>
    %cst_107 = arith.constant dense<0xFF800000> : vector<4x4xf32>
    %92 = vector.multi_reduction <maximumf>, %91, %cst_107 [1] : vector<4x4x4xf32> to vector<4x4xf32>
    %cst_108 = arith.constant dense<0xFF800000> : vector<4xf32>
    %93 = vector.multi_reduction <maximumf>, %92, %cst_108 [1] : vector<4x4xf32> to vector<4xf32>
    %94 = vector.shape_cast %93 : vector<4xf32> to vector<4x1xf32>
    %cst_109 = arith.constant 0.000000e+00 : f32
    %95 = vector.broadcast %cst_109 : f32 to vector<4x1xf32>
    %96 = arith.maximumf %94, %95 : vector<4x1xf32>
    %c0_110 = arith.constant 0 : index
    %c3_111 = arith.constant 3 : index
    %c4_112 = arith.constant 4 : index
    %c0_113 = arith.constant 0 : index
    %97 = vector.load %arg1[%c0_110, %c3_111, %c4_112, %c0_113] : memref<4x6x7x9xf32, #tpu.memory_space<vmem>>, vector<4x1x3x5xf32>
    %98 = vector.shape_cast %97 : vector<4x1x3x5xf32> to vector<4x3x5xf32>
    %c0_114 = arith.constant 0 : index
    %c4_115 = arith.constant 4 : index
    %c4_116 = arith.constant 4 : index
    %c0_117 = arith.constant 0 : index
    %99 = vector.load %arg1[%c0_114, %c4_115, %c4_116, %c0_117] : memref<4x6x7x9xf32, #tpu.memory_space<vmem>>, vector<4x1x3x5xf32>
    %100 = vector.shape_cast %99 : vector<4x1x3x5xf32> to vector<4x3x5xf32>
    %101 = arith.maximumf %98, %100 : vector<4x3x5xf32>
    %c0_118 = arith.constant 0 : index
    %c5_119 = arith.constant 5 : index
    %c4_120 = arith.constant 4 : index
    %c0_121 = arith.constant 0 : index
    %102 = vector.load %arg1[%c0_118, %c5_119, %c4_120, %c0_121] : memref<4x6x7x9xf32, #tpu.memory_space<vmem>>, vector<4x1x3x5xf32>
    %103 = vector.shape_cast %102 : vector<4x1x3x5xf32> to vector<4x3x5xf32>
    %104 = arith.maximumf %101, %103 : vector<4x3x5xf32>
    %cst_122 = arith.constant dense<0xFF800000> : vector<4x5xf32>
    %105 = vector.multi_reduction <maximumf>, %104, %cst_122 [1] : vector<4x3x5xf32> to vector<4x5xf32>
    %cst_123 = arith.constant dense<0xFF800000> : vector<4xf32>
    %106 = vector.multi_reduction <maximumf>, %105, %cst_123 [1] : vector<4x5xf32> to vector<4xf32>
    %107 = vector.shape_cast %106 : vector<4xf32> to vector<4x1xf32>
    %cst_124 = arith.constant 0.000000e+00 : f32
    %108 = vector.broadcast %cst_124 : f32 to vector<4x1xf32>
    %109 = arith.maximumf %107, %108 : vector<4x1xf32>
    %c0_125 = arith.constant 0 : index
    %c3_126 = arith.constant 3 : index
    %c4_127 = arith.constant 4 : index
    %c5_128 = arith.constant 5 : index
    %110 = vector.load %arg1[%c0_125, %c3_126, %c4_127, %c5_128] : memref<4x6x7x9xf32, #tpu.memory_space<vmem>>, vector<4x1x3x4xf32>
    %111 = vector.shape_cast %110 : vector<4x1x3x4xf32> to vector<4x3x4xf32>
    %c0_129 = arith.constant 0 : index
    %c4_130 = arith.constant 4 : index
    %c4_131 = arith.constant 4 : index
    %c5_132 = arith.constant 5 : index
    %112 = vector.load %arg1[%c0_129, %c4_130, %c4_131, %c5_132] : memref<4x6x7x9xf32, #tpu.memory_space<vmem>>, vector<4x1x3x4xf32>
    %113 = vector.shape_cast %112 : vector<4x1x3x4xf32> to vector<4x3x4xf32>
    %114 = arith.maximumf %111, %113 : vector<4x3x4xf32>
    %c0_133 = arith.constant 0 : index
    %c5_134 = arith.constant 5 : index
    %c4_135 = arith.constant 4 : index
    %c5_136 = arith.constant 5 : index
    %115 = vector.load %arg1[%c0_133, %c5_134, %c4_135, %c5_136] : memref<4x6x7x9xf32, #tpu.memory_space<vmem>>, vector<4x1x3x4xf32>
    %116 = vector.shape_cast %115 : vector<4x1x3x4xf32> to vector<4x3x4xf32>
    %117 = arith.maximumf %114, %116 : vector<4x3x4xf32>
    %cst_137 = arith.constant dense<0xFF800000> : vector<4x4xf32>
    %118 = vector.multi_reduction <maximumf>, %117, %cst_137 [1] : vector<4x3x4xf32> to vector<4x4xf32>
    %cst_138 = arith.constant dense<0xFF800000> : vector<4xf32>
    %119 = vector.multi_reduction <maximumf>, %118, %cst_138 [1] : vector<4x4xf32> to vector<4xf32>
    %120 = vector.shape_cast %119 : vector<4xf32> to vector<4x1xf32>
    %cst_139 = arith.constant 0.000000e+00 : f32
    %121 = vector.broadcast %cst_139 : f32 to vector<4x1xf32>
    %122 = arith.maximumf %120, %121 : vector<4x1xf32>
    %123 = tpu.concatenate %33, %46, %59, %72, %83, %96, %109, %122 in 1 : vector<4x1xf32>, vector<4x1xf32>, vector<4x1xf32>, vector<4x1xf32>, vector<4x1xf32>, vector<4x1xf32>, vector<4x1xf32>, vector<4x1xf32> -> vector<4x8xf32>
    %c0_140 = arith.constant 0 : index
    %c0_141 = arith.constant 0 : index
    %c0_142 = arith.constant 0 : index
    %124 = vector.load %arg3[%c0_140, %c0_141, %c0_142] : memref<1x4x8xf32, #tpu.memory_space<vmem>>, vector<1x4x8xf32>
    %125 = vector.shape_cast %124 : vector<1x4x8xf32> to vector<4x8xf32>
    %126 = vector.shape_cast %123 : vector<4x8xf32> to vector<1x4x8xf32>
    tpu.vector_store %arg3[%c0_140, %c0_141, %c0_142], %126 {strides = array<i32>} : memref<1x4x8xf32, #tpu.memory_space<vmem>>, vector<1x4x8xf32>,
    %c0_143 = arith.constant 0 : index
    %c0_144 = arith.constant 0 : index
    %c0_145 = arith.constant 0 : index
    %c0_146 = arith.constant 0 : index
    %127 = vector.load %arg1[%c0_143, %c0_144, %c0_145, %c0_146] : memref<4x6x7x9xf32, #tpu.memory_space<vmem>>, vector<4x1x2x3xf32>
    %128 = vector.shape_cast %127 : vector<4x1x2x3xf32> to vector<4x2x3xf32>
    %c0_147 = arith.constant 0 : index
    %c1_148 = arith.constant 1 : index
    %c0_149 = arith.constant 0 : index
    %c0_150 = arith.constant 0 : index
    %129 = vector.load %arg1[%c0_147, %c1_148, %c0_149, %c0_150] : memref<4x6x7x9xf32, #tpu.memory_space<vmem>>, vector<4x1x2x3xf32>
    %130 = vector.shape_cast %129 : vector<4x1x2x3xf32> to vector<4x2x3xf32>
    %131 = arith.maximumf %128, %130 : vector<4x2x3xf32>
    %cst_151 = arith.constant dense<0xFF800000> : vector<4x3xf32>
    %132 = vector.multi_reduction <maximumf>, %131, %cst_151 [1] : vector<4x2x3xf32> to vector<4x3xf32>
    %cst_152 = arith.constant dense<0xFF800000> : vector<4xf32>
    %133 = vector.multi_reduction <maximumf>, %132, %cst_152 [1] : vector<4x3xf32> to vector<4xf32>
    %134 = vector.shape_cast %133 : vector<4xf32> to vector<4x1xf32>
    %cst_153 = arith.constant 0.000000e+00 : f32
    %135 = vector.broadcast %cst_153 : f32 to vector<4x1xf32>
    %136 = arith.maximumf %134, %135 : vector<4x1xf32>
    %c0_154 = arith.constant 0 : index
    %c0_155 = arith.constant 0 : index
    %c0_156 = arith.constant 0 : index
    %c3_157 = arith.constant 3 : index
    %137 = vector.load %arg1[%c0_154, %c0_155, %c0_156, %c3_157] : memref<4x6x7x9xf32, #tpu.memory_space<vmem>>, vector<4x1x2x3xf32>
    %138 = vector.shape_cast %137 : vector<4x1x2x3xf32> to vector<4x2x3xf32>
    %c0_158 = arith.constant 0 : index
    %c1_159 = arith.constant 1 : index
    %c0_160 = arith.constant 0 : index
    %c3_161 = arith.constant 3 : index
    %139 = vector.load %arg1[%c0_158, %c1_159, %c0_160, %c3_161] : memref<4x6x7x9xf32, #tpu.memory_space<vmem>>, vector<4x1x2x3xf32>
    %140 = vector.shape_cast %139 : vector<4x1x2x3xf32> to vector<4x2x3xf32>
    %141 = arith.maximumf %138, %140 : vector<4x2x3xf32>
    %cst_162 = arith.constant dense<0xFF800000> : vector<4x3xf32>
    %142 = vector.multi_reduction <maximumf>, %141, %cst_162 [1] : vector<4x2x3xf32> to vector<4x3xf32>
    %cst_163 = arith.constant dense<0xFF800000> : vector<4xf32>
    %143 = vector.multi_reduction <maximumf>, %142, %cst_163 [1] : vector<4x3xf32> to vector<4xf32>
    %144 = vector.shape_cast %143 : vector<4xf32> to vector<4x1xf32>
    %cst_164 = arith.constant 0.000000e+00 : f32
    %145 = vector.broadcast %cst_164 : f32 to vector<4x1xf32>
    %146 = arith.maximumf %144, %145 : vector<4x1xf32>
    %c0_165 = arith.constant 0 : index
    %c0_166 = arith.constant 0 : index
    %c0_167 = arith.constant 0 : index
    %c6 = arith.constant 6 : index
    %147 = vector.load %arg1[%c0_165, %c0_166, %c0_167, %c6] : memref<4x6x7x9xf32, #tpu.memory_space<vmem>>, vector<4x1x2x3xf32>
    %148 = vector.shape_cast %147 : vector<4x1x2x3xf32> to vector<4x2x3xf32>
    %c0_168 = arith.constant 0 : index
    %c1_169 = arith.constant 1 : index
    %c0_170 = arith.constant 0 : index
    %c6_171 = arith.constant 6 : index
    %149 = vector.load %arg1[%c0_168, %c1_169, %c0_170, %c6_171] : memref<4x6x7x9xf32, #tpu.memory_space<vmem>>, vector<4x1x2x3xf32>
    %150 = vector.shape_cast %149 : vector<4x1x2x3xf32> to vector<4x2x3xf32>
    %151 = arith.maximumf %148, %150 : vector<4x2x3xf32>
    %cst_172 = arith.constant dense<0xFF800000> : vector<4x3xf32>
    %152 = vector.multi_reduction <maximumf>, %151, %cst_172 [1] : vector<4x2x3xf32> to vector<4x3xf32>
    %cst_173 = arith.constant dense<0xFF800000> : vector<4xf32>
    %153 = vector.multi_reduction <maximumf>, %152, %cst_173 [1] : vector<4x3xf32> to vector<4xf32>
    %154 = vector.shape_cast %153 : vector<4xf32> to vector<4x1xf32>
    %cst_174 = arith.constant 0.000000e+00 : f32
    %155 = vector.broadcast %cst_174 : f32 to vector<4x1xf32>
    %156 = arith.maximumf %154, %155 : vector<4x1xf32>
    %c0_175 = arith.constant 0 : index
    %c0_176 = arith.constant 0 : index
    %c2_177 = arith.constant 2 : index
    %c0_178 = arith.constant 0 : index
    %157 = vector.load %arg1[%c0_175, %c0_176, %c2_177, %c0_178] : memref<4x6x7x9xf32, #tpu.memory_space<vmem>>, vector<4x1x3x3xf32>
    %158 = vector.shape_cast %157 : vector<4x1x3x3xf32> to vector<4x3x3xf32>
    %c0_179 = arith.constant 0 : index
    %c1_180 = arith.constant 1 : index
    %c2_181 = arith.constant 2 : index
    %c0_182 = arith.constant 0 : index
    %159 = vector.load %arg1[%c0_179, %c1_180, %c2_181, %c0_182] : memref<4x6x7x9xf32, #tpu.memory_space<vmem>>, vector<4x1x3x3xf32>
    %160 = vector.shape_cast %159 : vector<4x1x3x3xf32> to vector<4x3x3xf32>
    %161 = arith.maximumf %158, %160 : vector<4x3x3xf32>
    %cst_183 = arith.constant dense<0xFF800000> : vector<4x3xf32>
    %162 = vector.multi_reduction <maximumf>, %161, %cst_183 [1] : vector<4x3x3xf32> to vector<4x3xf32>
    %cst_184 = arith.constant dense<0xFF800000> : vector<4xf32>
    %163 = vector.multi_reduction <maximumf>, %162, %cst_184 [1] : vector<4x3xf32> to vector<4xf32>
    %164 = vector.shape_cast %163 : vector<4xf32> to vector<4x1xf32>
    %c0_185 = arith.constant 0 : index
    %c0_186 = arith.constant 0 : index
    %c2_187 = arith.constant 2 : index
    %c3_188 = arith.constant 3 : index
    %165 = vector.load %arg1[%c0_185, %c0_186, %c2_187, %c3_188] : memref<4x6x7x9xf32, #tpu.memory_space<vmem>>, vector<4x1x3x3xf32>
    %166 = vector.shape_cast %165 : vector<4x1x3x3xf32> to vector<4x3x3xf32>
    %c0_189 = arith.constant 0 : index
    %c1_190 = arith.constant 1 : index
    %c2_191 = arith.constant 2 : index
    %c3_192 = arith.constant 3 : index
    %167 = vector.load %arg1[%c0_189, %c1_190, %c2_191, %c3_192] : memref<4x6x7x9xf32, #tpu.memory_space<vmem>>, vector<4x1x3x3xf32>
    %168 = vector.shape_cast %167 : vector<4x1x3x3xf32> to vector<4x3x3xf32>
    %169 = arith.maximumf %166, %168 : vector<4x3x3xf32>
    %cst_193 = arith.constant dense<0xFF800000> : vector<4x3xf32>
    %170 = vector.multi_reduction <maximumf>, %169, %cst_193 [1] : vector<4x3x3xf32> to vector<4x3xf32>
    %cst_194 = arith.constant dense<0xFF800000> : vector<4xf32>
    %171 = vector.multi_reduction <maximumf>, %170, %cst_194 [1] : vector<4x3xf32> to vector<4xf32>
    %172 = vector.shape_cast %171 : vector<4xf32> to vector<4x1xf32>
    %c0_195 = arith.constant 0 : index
    %c0_196 = arith.constant 0 : index
    %c2_197 = arith.constant 2 : index
    %c6_198 = arith.constant 6 : index
    %173 = vector.load %arg1[%c0_195, %c0_196, %c2_197, %c6_198] : memref<4x6x7x9xf32, #tpu.memory_space<vmem>>, vector<4x1x3x3xf32>
    %174 = vector.shape_cast %173 : vector<4x1x3x3xf32> to vector<4x3x3xf32>
    %c0_199 = arith.constant 0 : index
    %c1_200 = arith.constant 1 : index
    %c2_201 = arith.constant 2 : index
    %c6_202 = arith.constant 6 : index
    %175 = vector.load %arg1[%c0_199, %c1_200, %c2_201, %c6_202] : memref<4x6x7x9xf32, #tpu.memory_space<vmem>>, vector<4x1x3x3xf32>
    %176 = vector.shape_cast %175 : vector<4x1x3x3xf32> to vector<4x3x3xf32>
    %177 = arith.maximumf %174, %176 : vector<4x3x3xf32>
    %cst_203 = arith.constant dense<0xFF800000> : vector<4x3xf32>
    %178 = vector.multi_reduction <maximumf>, %177, %cst_203 [1] : vector<4x3x3xf32> to vector<4x3xf32>
    %cst_204 = arith.constant dense<0xFF800000> : vector<4xf32>
    %179 = vector.multi_reduction <maximumf>, %178, %cst_204 [1] : vector<4x3xf32> to vector<4xf32>
    %180 = vector.shape_cast %179 : vector<4xf32> to vector<4x1xf32>
    %c0_205 = arith.constant 0 : index
    %c0_206 = arith.constant 0 : index
    %c5_207 = arith.constant 5 : index
    %c0_208 = arith.constant 0 : index
    %181 = vector.load %arg1[%c0_205, %c0_206, %c5_207, %c0_208] : memref<4x6x7x9xf32, #tpu.memory_space<vmem>>, vector<4x1x2x3xf32>
    %182 = vector.shape_cast %181 : vector<4x1x2x3xf32> to vector<4x2x3xf32>
    %c0_209 = arith.constant 0 : index
    %c1_210 = arith.constant 1 : index
    %c5_211 = arith.constant 5 : index
    %c0_212 = arith.constant 0 : index
    %183 = vector.load %arg1[%c0_209, %c1_210, %c5_211, %c0_212] : memref<4x6x7x9xf32, #tpu.memory_space<vmem>>, vector<4x1x2x3xf32>
    %184 = vector.shape_cast %183 : vector<4x1x2x3xf32> to vector<4x2x3xf32>
    %185 = arith.maximumf %182, %184 : vector<4x2x3xf32>
    %cst_213 = arith.constant dense<0xFF800000> : vector<4x3xf32>
    %186 = vector.multi_reduction <maximumf>, %185, %cst_213 [1] : vector<4x2x3xf32> to vector<4x3xf32>
    %cst_214 = arith.constant dense<0xFF800000> : vector<4xf32>
    %187 = vector.multi_reduction <maximumf>, %186, %cst_214 [1] : vector<4x3xf32> to vector<4xf32>
    %188 = vector.shape_cast %187 : vector<4xf32> to vector<4x1xf32>
    %cst_215 = arith.constant 0.000000e+00 : f32
    %189 = vector.broadcast %cst_215 : f32 to vector<4x1xf32>
    %190 = arith.maximumf %188, %189 : vector<4x1xf32>
    %c0_216 = arith.constant 0 : index
    %c0_217 = arith.constant 0 : index
    %c5_218 = arith.constant 5 : index
    %c3_219 = arith.constant 3 : index
    %191 = vector.load %arg1[%c0_216, %c0_217, %c5_218, %c3_219] : memref<4x6x7x9xf32, #tpu.memory_space<vmem>>, vector<4x1x2x3xf32>
    %192 = vector.shape_cast %191 : vector<4x1x2x3xf32> to vector<4x2x3xf32>
    %c0_220 = arith.constant 0 : index
    %c1_221 = arith.constant 1 : index
    %c5_222 = arith.constant 5 : index
    %c3_223 = arith.constant 3 : index
    %193 = vector.load %arg1[%c0_220, %c1_221, %c5_222, %c3_223] : memref<4x6x7x9xf32, #tpu.memory_space<vmem>>, vector<4x1x2x3xf32>
    %194 = vector.shape_cast %193 : vector<4x1x2x3xf32> to vector<4x2x3xf32>
    %195 = arith.maximumf %192, %194 : vector<4x2x3xf32>
    %cst_224 = arith.constant dense<0xFF800000> : vector<4x3xf32>
    %196 = vector.multi_reduction <maximumf>, %195, %cst_224 [1] : vector<4x2x3xf32> to vector<4x3xf32>
    %cst_225 = arith.constant dense<0xFF800000> : vector<4xf32>
    %197 = vector.multi_reduction <maximumf>, %196, %cst_225 [1] : vector<4x3xf32> to vector<4xf32>
    %198 = vector.shape_cast %197 : vector<4xf32> to vector<4x1xf32>
    %cst_226 = arith.constant 0.000000e+00 : f32
    %199 = vector.broadcast %cst_226 : f32 to vector<4x1xf32>
    %200 = arith.maximumf %198, %199 : vector<4x1xf32>
    %c0_227 = arith.constant 0 : index
    %c0_228 = arith.constant 0 : index
    %c5_229 = arith.constant 5 : index
    %c6_230 = arith.constant 6 : index
    %201 = vector.load %arg1[%c0_227, %c0_228, %c5_229, %c6_230] : memref<4x6x7x9xf32, #tpu.memory_space<vmem>>, vector<4x1x2x3xf32>
    %202 = vector.shape_cast %201 : vector<4x1x2x3xf32> to vector<4x2x3xf32>
    %c0_231 = arith.constant 0 : index
    %c1_232 = arith.constant 1 : index
    %c5_233 = arith.constant 5 : index
    %c6_234 = arith.constant 6 : index
    %203 = vector.load %arg1[%c0_231, %c1_232, %c5_233, %c6_234] : memref<4x6x7x9xf32, #tpu.memory_space<vmem>>, vector<4x1x2x3xf32>
    %204 = vector.shape_cast %203 : vector<4x1x2x3xf32> to vector<4x2x3xf32>
    %205 = arith.maximumf %202, %204 : vector<4x2x3xf32>
    %cst_235 = arith.constant dense<0xFF800000> : vector<4x3xf32>
    %206 = vector.multi_reduction <maximumf>, %205, %cst_235 [1] : vector<4x2x3xf32> to vector<4x3xf32>
    %cst_236 = arith.constant dense<0xFF800000> : vector<4xf32>
    %207 = vector.multi_reduction <maximumf>, %206, %cst_236 [1] : vector<4x3xf32> to vector<4xf32>
    %208 = vector.shape_cast %207 : vector<4xf32> to vector<4x1xf32>
    %cst_237 = arith.constant 0.000000e+00 : f32
    %209 = vector.broadcast %cst_237 : f32 to vector<4x1xf32>
    %210 = arith.maximumf %208, %209 : vector<4x1xf32>
    %c0_238 = arith.constant 0 : index
    %c2_239 = arith.constant 2 : index
    %c0_240 = arith.constant 0 : index
    %c0_241 = arith.constant 0 : index
    %211 = vector.load %arg1[%c0_238, %c2_239, %c0_240, %c0_241] : memref<4x6x7x9xf32, #tpu.memory_space<vmem>>, vector<4x1x2x3xf32>
    %212 = vector.shape_cast %211 : vector<4x1x2x3xf32> to vector<4x2x3xf32>
    %c0_242 = arith.constant 0 : index
    %c3_243 = arith.constant 3 : index
    %c0_244 = arith.constant 0 : index
    %c0_245 = arith.constant 0 : index
    %213 = vector.load %arg1[%c0_242, %c3_243, %c0_244, %c0_245] : memref<4x6x7x9xf32, #tpu.memory_space<vmem>>, vector<4x1x2x3xf32>
    %214 = vector.shape_cast %213 : vector<4x1x2x3xf32> to vector<4x2x3xf32>
    %215 = arith.maximumf %212, %214 : vector<4x2x3xf32>
    %cst_246 = arith.constant dense<0xFF800000> : vector<4x3xf32>
    %216 = vector.multi_reduction <maximumf>, %215, %cst_246 [1] : vector<4x2x3xf32> to vector<4x3xf32>
    %cst_247 = arith.constant dense<0xFF800000> : vector<4xf32>
    %217 = vector.multi_reduction <maximumf>, %216, %cst_247 [1] : vector<4x3xf32> to vector<4xf32>
    %218 = vector.shape_cast %217 : vector<4xf32> to vector<4x1xf32>
    %cst_248 = arith.constant 0.000000e+00 : f32
    %219 = vector.broadcast %cst_248 : f32 to vector<4x1xf32>
    %220 = arith.maximumf %218, %219 : vector<4x1xf32>
    %c0_249 = arith.constant 0 : index
    %c2_250 = arith.constant 2 : index
    %c0_251 = arith.constant 0 : index
    %c3_252 = arith.constant 3 : index
    %221 = vector.load %arg1[%c0_249, %c2_250, %c0_251, %c3_252] : memref<4x6x7x9xf32, #tpu.memory_space<vmem>>, vector<4x1x2x3xf32>
    %222 = vector.shape_cast %221 : vector<4x1x2x3xf32> to vector<4x2x3xf32>
    %c0_253 = arith.constant 0 : index
    %c3_254 = arith.constant 3 : index
    %c0_255 = arith.constant 0 : index
    %c3_256 = arith.constant 3 : index
    %223 = vector.load %arg1[%c0_253, %c3_254, %c0_255, %c3_256] : memref<4x6x7x9xf32, #tpu.memory_space<vmem>>, vector<4x1x2x3xf32>
    %224 = vector.shape_cast %223 : vector<4x1x2x3xf32> to vector<4x2x3xf32>
    %225 = arith.maximumf %222, %224 : vector<4x2x3xf32>
    %cst_257 = arith.constant dense<0xFF800000> : vector<4x3xf32>
    %226 = vector.multi_reduction <maximumf>, %225, %cst_257 [1] : vector<4x2x3xf32> to vector<4x3xf32>
    %cst_258 = arith.constant dense<0xFF800000> : vector<4xf32>
    %227 = vector.multi_reduction <maximumf>, %226, %cst_258 [1] : vector<4x3xf32> to vector<4xf32>
    %228 = vector.shape_cast %227 : vector<4xf32> to vector<4x1xf32>
    %cst_259 = arith.constant 0.000000e+00 : f32
    %229 = vector.broadcast %cst_259 : f32 to vector<4x1xf32>
    %230 = arith.maximumf %228, %229 : vector<4x1xf32>
    %c0_260 = arith.constant 0 : index
    %c2_261 = arith.constant 2 : index
    %c0_262 = arith.constant 0 : index
    %c6_263 = arith.constant 6 : index
    %231 = vector.load %arg1[%c0_260, %c2_261, %c0_262, %c6_263] : memref<4x6x7x9xf32, #tpu.memory_space<vmem>>, vector<4x1x2x3xf32>
    %232 = vector.shape_cast %231 : vector<4x1x2x3xf32> to vector<4x2x3xf32>
    %c0_264 = arith.constant 0 : index
    %c3_265 = arith.constant 3 : index
    %c0_266 = arith.constant 0 : index
    %c6_267 = arith.constant 6 : index
    %233 = vector.load %arg1[%c0_264, %c3_265, %c0_266, %c6_267] : memref<4x6x7x9xf32, #tpu.memory_space<vmem>>, vector<4x1x2x3xf32>
    %234 = vector.shape_cast %233 : vector<4x1x2x3xf32> to vector<4x2x3xf32>
    %235 = arith.maximumf %232, %234 : vector<4x2x3xf32>
    %cst_268 = arith.constant dense<0xFF800000> : vector<4x3xf32>
    %236 = vector.multi_reduction <maximumf>, %235, %cst_268 [1] : vector<4x2x3xf32> to vector<4x3xf32>
    %cst_269 = arith.constant dense<0xFF800000> : vector<4xf32>
    %237 = vector.multi_reduction <maximumf>, %236, %cst_269 [1] : vector<4x3xf32> to vector<4xf32>
    %238 = vector.shape_cast %237 : vector<4xf32> to vector<4x1xf32>
    %cst_270 = arith.constant 0.000000e+00 : f32
    %239 = vector.broadcast %cst_270 : f32 to vector<4x1xf32>
    %240 = arith.maximumf %238, %239 : vector<4x1xf32>
    %c0_271 = arith.constant 0 : index
    %c2_272 = arith.constant 2 : index
    %c2_273 = arith.constant 2 : index
    %c0_274 = arith.constant 0 : index
    %241 = vector.load %arg1[%c0_271, %c2_272, %c2_273, %c0_274] : memref<4x6x7x9xf32, #tpu.memory_space<vmem>>, vector<4x1x3x3xf32>
    %242 = vector.shape_cast %241 : vector<4x1x3x3xf32> to vector<4x3x3xf32>
    %c0_275 = arith.constant 0 : index
    %c3_276 = arith.constant 3 : index
    %c2_277 = arith.constant 2 : index
    %c0_278 = arith.constant 0 : index
    %243 = vector.load %arg1[%c0_275, %c3_276, %c2_277, %c0_278] : memref<4x6x7x9xf32, #tpu.memory_space<vmem>>, vector<4x1x3x3xf32>
    %244 = vector.shape_cast %243 : vector<4x1x3x3xf32> to vector<4x3x3xf32>
    %245 = arith.maximumf %242, %244 : vector<4x3x3xf32>
    %cst_279 = arith.constant dense<0xFF800000> : vector<4x3xf32>
    %246 = vector.multi_reduction <maximumf>, %245, %cst_279 [1] : vector<4x3x3xf32> to vector<4x3xf32>
    %cst_280 = arith.constant dense<0xFF800000> : vector<4xf32>
    %247 = vector.multi_reduction <maximumf>, %246, %cst_280 [1] : vector<4x3xf32> to vector<4xf32>
    %248 = vector.shape_cast %247 : vector<4xf32> to vector<4x1xf32>
    %c0_281 = arith.constant 0 : index
    %c2_282 = arith.constant 2 : index
    %c2_283 = arith.constant 2 : index
    %c3_284 = arith.constant 3 : index
    %249 = vector.load %arg1[%c0_281, %c2_282, %c2_283, %c3_284] : memref<4x6x7x9xf32, #tpu.memory_space<vmem>>, vector<4x1x3x3xf32>
    %250 = vector.shape_cast %249 : vector<4x1x3x3xf32> to vector<4x3x3xf32>
    %c0_285 = arith.constant 0 : index
    %c3_286 = arith.constant 3 : index
    %c2_287 = arith.constant 2 : index
    %c3_288 = arith.constant 3 : index
    %251 = vector.load %arg1[%c0_285, %c3_286, %c2_287, %c3_288] : memref<4x6x7x9xf32, #tpu.memory_space<vmem>>, vector<4x1x3x3xf32>
    %252 = vector.shape_cast %251 : vector<4x1x3x3xf32> to vector<4x3x3xf32>
    %253 = arith.maximumf %250, %252 : vector<4x3x3xf32>
    %cst_289 = arith.constant dense<0xFF800000> : vector<4x3xf32>
    %254 = vector.multi_reduction <maximumf>, %253, %cst_289 [1] : vector<4x3x3xf32> to vector<4x3xf32>
    %cst_290 = arith.constant dense<0xFF800000> : vector<4xf32>
    %255 = vector.multi_reduction <maximumf>, %254, %cst_290 [1] : vector<4x3xf32> to vector<4xf32>
    %256 = vector.shape_cast %255 : vector<4xf32> to vector<4x1xf32>
    %c0_291 = arith.constant 0 : index
    %c2_292 = arith.constant 2 : index
    %c2_293 = arith.constant 2 : index
    %c6_294 = arith.constant 6 : index
    %257 = vector.load %arg1[%c0_291, %c2_292, %c2_293, %c6_294] : memref<4x6x7x9xf32, #tpu.memory_space<vmem>>, vector<4x1x3x3xf32>
    %258 = vector.shape_cast %257 : vector<4x1x3x3xf32> to vector<4x3x3xf32>
    %c0_295 = arith.constant 0 : index
    %c3_296 = arith.constant 3 : index
    %c2_297 = arith.constant 2 : index
    %c6_298 = arith.constant 6 : index
    %259 = vector.load %arg1[%c0_295, %c3_296, %c2_297, %c6_298] : memref<4x6x7x9xf32, #tpu.memory_space<vmem>>, vector<4x1x3x3xf32>
    %260 = vector.shape_cast %259 : vector<4x1x3x3xf32> to vector<4x3x3xf32>
    %261 = arith.maximumf %258, %260 : vector<4x3x3xf32>
    %cst_299 = arith.constant dense<0xFF800000> : vector<4x3xf32>
    %262 = vector.multi_reduction <maximumf>, %261, %cst_299 [1] : vector<4x3x3xf32> to vector<4x3xf32>
    %cst_300 = arith.constant dense<0xFF800000> : vector<4xf32>
    %263 = vector.multi_reduction <maximumf>, %262, %cst_300 [1] : vector<4x3xf32> to vector<4xf32>
    %264 = vector.shape_cast %263 : vector<4xf32> to vector<4x1xf32>
    %c0_301 = arith.constant 0 : index
    %c2_302 = arith.constant 2 : index
    %c5_303 = arith.constant 5 : index
    %c0_304 = arith.constant 0 : index
    %265 = vector.load %arg1[%c0_301, %c2_302, %c5_303, %c0_304] : memref<4x6x7x9xf32, #tpu.memory_space<vmem>>, vector<4x1x2x3xf32>
    %266 = vector.shape_cast %265 : vector<4x1x2x3xf32> to vector<4x2x3xf32>
    %c0_305 = arith.constant 0 : index
    %c3_306 = arith.constant 3 : index
    %c5_307 = arith.constant 5 : index
    %c0_308 = arith.constant 0 : index
    %267 = vector.load %arg1[%c0_305, %c3_306, %c5_307, %c0_308] : memref<4x6x7x9xf32, #tpu.memory_space<vmem>>, vector<4x1x2x3xf32>
    %268 = vector.shape_cast %267 : vector<4x1x2x3xf32> to vector<4x2x3xf32>
    %269 = arith.maximumf %266, %268 : vector<4x2x3xf32>
    %cst_309 = arith.constant dense<0xFF800000> : vector<4x3xf32>
    %270 = vector.multi_reduction <maximumf>, %269, %cst_309 [1] : vector<4x2x3xf32> to vector<4x3xf32>
    %cst_310 = arith.constant dense<0xFF800000> : vector<4xf32>
    %271 = vector.multi_reduction <maximumf>, %270, %cst_310 [1] : vector<4x3xf32> to vector<4xf32>
    %272 = vector.shape_cast %271 : vector<4xf32> to vector<4x1xf32>
    %cst_311 = arith.constant 0.000000e+00 : f32
    %273 = vector.broadcast %cst_311 : f32 to vector<4x1xf32>
    %274 = arith.maximumf %272, %273 : vector<4x1xf32>
    %c0_312 = arith.constant 0 : index
    %c2_313 = arith.constant 2 : index
    %c5_314 = arith.constant 5 : index
    %c3_315 = arith.constant 3 : index
    %275 = vector.load %arg1[%c0_312, %c2_313, %c5_314, %c3_315] : memref<4x6x7x9xf32, #tpu.memory_space<vmem>>, vector<4x1x2x3xf32>
    %276 = vector.shape_cast %275 : vector<4x1x2x3xf32> to vector<4x2x3xf32>
    %c0_316 = arith.constant 0 : index
    %c3_317 = arith.constant 3 : index
    %c5_318 = arith.constant 5 : index
    %c3_319 = arith.constant 3 : index
    %277 = vector.load %arg1[%c0_316, %c3_317, %c5_318, %c3_319] : memref<4x6x7x9xf32, #tpu.memory_space<vmem>>, vector<4x1x2x3xf32>
    %278 = vector.shape_cast %277 : vector<4x1x2x3xf32> to vector<4x2x3xf32>
    %279 = arith.maximumf %276, %278 : vector<4x2x3xf32>
    %cst_320 = arith.constant dense<0xFF800000> : vector<4x3xf32>
    %280 = vector.multi_reduction <maximumf>, %279, %cst_320 [1] : vector<4x2x3xf32> to vector<4x3xf32>
    %cst_321 = arith.constant dense<0xFF800000> : vector<4xf32>
    %281 = vector.multi_reduction <maximumf>, %280, %cst_321 [1] : vector<4x3xf32> to vector<4xf32>
    %282 = vector.shape_cast %281 : vector<4xf32> to vector<4x1xf32>
    %cst_322 = arith.constant 0.000000e+00 : f32
    %283 = vector.broadcast %cst_322 : f32 to vector<4x1xf32>
    %284 = arith.maximumf %282, %283 : vector<4x1xf32>
    %c0_323 = arith.constant 0 : index
    %c2_324 = arith.constant 2 : index
    %c5_325 = arith.constant 5 : index
    %c6_326 = arith.constant 6 : index
    %285 = vector.load %arg1[%c0_323, %c2_324, %c5_325, %c6_326] : memref<4x6x7x9xf32, #tpu.memory_space<vmem>>, vector<4x1x2x3xf32>
    %286 = vector.shape_cast %285 : vector<4x1x2x3xf32> to vector<4x2x3xf32>
    %c0_327 = arith.constant 0 : index
    %c3_328 = arith.constant 3 : index
    %c5_329 = arith.constant 5 : index
    %c6_330 = arith.constant 6 : index
    %287 = vector.load %arg1[%c0_327, %c3_328, %c5_329, %c6_330] : memref<4x6x7x9xf32, #tpu.memory_space<vmem>>, vector<4x1x2x3xf32>
    %288 = vector.shape_cast %287 : vector<4x1x2x3xf32> to vector<4x2x3xf32>
    %289 = arith.maximumf %286, %288 : vector<4x2x3xf32>
    %cst_331 = arith.constant dense<0xFF800000> : vector<4x3xf32>
    %290 = vector.multi_reduction <maximumf>, %289, %cst_331 [1] : vector<4x2x3xf32> to vector<4x3xf32>
    %cst_332 = arith.constant dense<0xFF800000> : vector<4xf32>
    %291 = vector.multi_reduction <maximumf>, %290, %cst_332 [1] : vector<4x3xf32> to vector<4xf32>
    %292 = vector.shape_cast %291 : vector<4xf32> to vector<4x1xf32>
    %cst_333 = arith.constant 0.000000e+00 : f32
    %293 = vector.broadcast %cst_333 : f32 to vector<4x1xf32>
    %294 = arith.maximumf %292, %293 : vector<4x1xf32>
    %c0_334 = arith.constant 0 : index
    %c4_335 = arith.constant 4 : index
    %c0_336 = arith.constant 0 : index
    %c0_337 = arith.constant 0 : index
    %295 = vector.load %arg1[%c0_334, %c4_335, %c0_336, %c0_337] : memref<4x6x7x9xf32, #tpu.memory_space<vmem>>, vector<4x1x2x3xf32>
    %296 = vector.shape_cast %295 : vector<4x1x2x3xf32> to vector<4x2x3xf32>
    %c0_338 = arith.constant 0 : index
    %c5_339 = arith.constant 5 : index
    %c0_340 = arith.constant 0 : index
    %c0_341 = arith.constant 0 : index
    %297 = vector.load %arg1[%c0_338, %c5_339, %c0_340, %c0_341] : memref<4x6x7x9xf32, #tpu.memory_space<vmem>>, vector<4x1x2x3xf32>
    %298 = vector.shape_cast %297 : vector<4x1x2x3xf32> to vector<4x2x3xf32>
    %299 = arith.maximumf %296, %298 : vector<4x2x3xf32>
    %cst_342 = arith.constant dense<0xFF800000> : vector<4x3xf32>
    %300 = vector.multi_reduction <maximumf>, %299, %cst_342 [1] : vector<4x2x3xf32> to vector<4x3xf32>
    %cst_343 = arith.constant dense<0xFF800000> : vector<4xf32>
    %301 = vector.multi_reduction <maximumf>, %300, %cst_343 [1] : vector<4x3xf32> to vector<4xf32>
    %302 = vector.shape_cast %301 : vector<4xf32> to vector<4x1xf32>
    %cst_344 = arith.constant 0.000000e+00 : f32
    %303 = vector.broadcast %cst_344 : f32 to vector<4x1xf32>
    %304 = arith.maximumf %302, %303 : vector<4x1xf32>
    %c0_345 = arith.constant 0 : index
    %c4_346 = arith.constant 4 : index
    %c0_347 = arith.constant 0 : index
    %c3_348 = arith.constant 3 : index
    %305 = vector.load %arg1[%c0_345, %c4_346, %c0_347, %c3_348] : memref<4x6x7x9xf32, #tpu.memory_space<vmem>>, vector<4x1x2x3xf32>
    %306 = vector.shape_cast %305 : vector<4x1x2x3xf32> to vector<4x2x3xf32>
    %c0_349 = arith.constant 0 : index
    %c5_350 = arith.constant 5 : index
    %c0_351 = arith.constant 0 : index
    %c3_352 = arith.constant 3 : index
    %307 = vector.load %arg1[%c0_349, %c5_350, %c0_351, %c3_352] : memref<4x6x7x9xf32, #tpu.memory_space<vmem>>, vector<4x1x2x3xf32>
    %308 = vector.shape_cast %307 : vector<4x1x2x3xf32> to vector<4x2x3xf32>
    %309 = arith.maximumf %306, %308 : vector<4x2x3xf32>
    %cst_353 = arith.constant dense<0xFF800000> : vector<4x3xf32>
    %310 = vector.multi_reduction <maximumf>, %309, %cst_353 [1] : vector<4x2x3xf32> to vector<4x3xf32>
    %cst_354 = arith.constant dense<0xFF800000> : vector<4xf32>
    %311 = vector.multi_reduction <maximumf>, %310, %cst_354 [1] : vector<4x3xf32> to vector<4xf32>
    %312 = vector.shape_cast %311 : vector<4xf32> to vector<4x1xf32>
    %cst_355 = arith.constant 0.000000e+00 : f32
    %313 = vector.broadcast %cst_355 : f32 to vector<4x1xf32>
    %314 = arith.maximumf %312, %313 : vector<4x1xf32>
    %c0_356 = arith.constant 0 : index
    %c4_357 = arith.constant 4 : index
    %c0_358 = arith.constant 0 : index
    %c6_359 = arith.constant 6 : index
    %315 = vector.load %arg1[%c0_356, %c4_357, %c0_358, %c6_359] : memref<4x6x7x9xf32, #tpu.memory_space<vmem>>, vector<4x1x2x3xf32>
    %316 = vector.shape_cast %315 : vector<4x1x2x3xf32> to vector<4x2x3xf32>
    %c0_360 = arith.constant 0 : index
    %c5_361 = arith.constant 5 : index
    %c0_362 = arith.constant 0 : index
    %c6_363 = arith.constant 6 : index
    %317 = vector.load %arg1[%c0_360, %c5_361, %c0_362, %c6_363] : memref<4x6x7x9xf32, #tpu.memory_space<vmem>>, vector<4x1x2x3xf32>
    %318 = vector.shape_cast %317 : vector<4x1x2x3xf32> to vector<4x2x3xf32>
    %319 = arith.maximumf %316, %318 : vector<4x2x3xf32>
    %cst_364 = arith.constant dense<0xFF800000> : vector<4x3xf32>
    %320 = vector.multi_reduction <maximumf>, %319, %cst_364 [1] : vector<4x2x3xf32> to vector<4x3xf32>
    %cst_365 = arith.constant dense<0xFF800000> : vector<4xf32>
    %321 = vector.multi_reduction <maximumf>, %320, %cst_365 [1] : vector<4x3xf32> to vector<4xf32>
    %322 = vector.shape_cast %321 : vector<4xf32> to vector<4x1xf32>
    %cst_366 = arith.constant 0.000000e+00 : f32
    %323 = vector.broadcast %cst_366 : f32 to vector<4x1xf32>
    %324 = arith.maximumf %322, %323 : vector<4x1xf32>
    %c0_367 = arith.constant 0 : index
    %c4_368 = arith.constant 4 : index
    %c2_369 = arith.constant 2 : index
    %c0_370 = arith.constant 0 : index
    %325 = vector.load %arg1[%c0_367, %c4_368, %c2_369, %c0_370] : memref<4x6x7x9xf32, #tpu.memory_space<vmem>>, vector<4x1x3x3xf32>
    %326 = vector.shape_cast %325 : vector<4x1x3x3xf32> to vector<4x3x3xf32>
    %c0_371 = arith.constant 0 : index
    %c5_372 = arith.constant 5 : index
    %c2_373 = arith.constant 2 : index
    %c0_374 = arith.constant 0 : index
    %327 = vector.load %arg1[%c0_371, %c5_372, %c2_373, %c0_374] : memref<4x6x7x9xf32, #tpu.memory_space<vmem>>, vector<4x1x3x3xf32>
    %328 = vector.shape_cast %327 : vector<4x1x3x3xf32> to vector<4x3x3xf32>
    %329 = arith.maximumf %326, %328 : vector<4x3x3xf32>
    %cst_375 = arith.constant dense<0xFF800000> : vector<4x3xf32>
    %330 = vector.multi_reduction <maximumf>, %329, %cst_375 [1] : vector<4x3x3xf32> to vector<4x3xf32>
    %cst_376 = arith.constant dense<0xFF800000> : vector<4xf32>
    %331 = vector.multi_reduction <maximumf>, %330, %cst_376 [1] : vector<4x3xf32> to vector<4xf32>
    %332 = vector.shape_cast %331 : vector<4xf32> to vector<4x1xf32>
    %c0_377 = arith.constant 0 : index
    %c4_378 = arith.constant 4 : index
    %c2_379 = arith.constant 2 : index
    %c3_380 = arith.constant 3 : index
    %333 = vector.load %arg1[%c0_377, %c4_378, %c2_379, %c3_380] : memref<4x6x7x9xf32, #tpu.memory_space<vmem>>, vector<4x1x3x3xf32>
    %334 = vector.shape_cast %333 : vector<4x1x3x3xf32> to vector<4x3x3xf32>
    %c0_381 = arith.constant 0 : index
    %c5_382 = arith.constant 5 : index
    %c2_383 = arith.constant 2 : index
    %c3_384 = arith.constant 3 : index
    %335 = vector.load %arg1[%c0_381, %c5_382, %c2_383, %c3_384] : memref<4x6x7x9xf32, #tpu.memory_space<vmem>>, vector<4x1x3x3xf32>
    %336 = vector.shape_cast %335 : vector<4x1x3x3xf32> to vector<4x3x3xf32>
    %337 = arith.maximumf %334, %336 : vector<4x3x3xf32>
    %cst_385 = arith.constant dense<0xFF800000> : vector<4x3xf32>
    %338 = vector.multi_reduction <maximumf>, %337, %cst_385 [1] : vector<4x3x3xf32> to vector<4x3xf32>
    %cst_386 = arith.constant dense<0xFF800000> : vector<4xf32>
    %339 = vector.multi_reduction <maximumf>, %338, %cst_386 [1] : vector<4x3xf32> to vector<4xf32>
    %340 = vector.shape_cast %339 : vector<4xf32> to vector<4x1xf32>
    %c0_387 = arith.constant 0 : index
    %c4_388 = arith.constant 4 : index
    %c2_389 = arith.constant 2 : index
    %c6_390 = arith.constant 6 : index
    %341 = vector.load %arg1[%c0_387, %c4_388, %c2_389, %c6_390] : memref<4x6x7x9xf32, #tpu.memory_space<vmem>>, vector<4x1x3x3xf32>
    %342 = vector.shape_cast %341 : vector<4x1x3x3xf32> to vector<4x3x3xf32>
    %c0_391 = arith.constant 0 : index
    %c5_392 = arith.constant 5 : index
    %c2_393 = arith.constant 2 : index
    %c6_394 = arith.constant 6 : index
    %343 = vector.load %arg1[%c0_391, %c5_392, %c2_393, %c6_394] : memref<4x6x7x9xf32, #tpu.memory_space<vmem>>, vector<4x1x3x3xf32>
    %344 = vector.shape_cast %343 : vector<4x1x3x3xf32> to vector<4x3x3xf32>
    %345 = arith.maximumf %342, %344 : vector<4x3x3xf32>
    %cst_395 = arith.constant dense<0xFF800000> : vector<4x3xf32>
    %346 = vector.multi_reduction <maximumf>, %345, %cst_395 [1] : vector<4x3x3xf32> to vector<4x3xf32>
    %cst_396 = arith.constant dense<0xFF800000> : vector<4xf32>
    %347 = vector.multi_reduction <maximumf>, %346, %cst_396 [1] : vector<4x3xf32> to vector<4xf32>
    %348 = vector.shape_cast %347 : vector<4xf32> to vector<4x1xf32>
    %c0_397 = arith.constant 0 : index
    %c4_398 = arith.constant 4 : index
    %c5_399 = arith.constant 5 : index
    %c0_400 = arith.constant 0 : index
    %349 = vector.load %arg1[%c0_397, %c4_398, %c5_399, %c0_400] : memref<4x6x7x9xf32, #tpu.memory_space<vmem>>, vector<4x1x2x3xf32>
    %350 = vector.shape_cast %349 : vector<4x1x2x3xf32> to vector<4x2x3xf32>
    %c0_401 = arith.constant 0 : index
    %c5_402 = arith.constant 5 : index
    %c5_403 = arith.constant 5 : index
    %c0_404 = arith.constant 0 : index
    %351 = vector.load %arg1[%c0_401, %c5_402, %c5_403, %c0_404] : memref<4x6x7x9xf32, #tpu.memory_space<vmem>>, vector<4x1x2x3xf32>
    %352 = vector.shape_cast %351 : vector<4x1x2x3xf32> to vector<4x2x3xf32>
    %353 = arith.maximumf %350, %352 : vector<4x2x3xf32>
    %cst_405 = arith.constant dense<0xFF800000> : vector<4x3xf32>
    %354 = vector.multi_reduction <maximumf>, %353, %cst_405 [1] : vector<4x2x3xf32> to vector<4x3xf32>
    %cst_406 = arith.constant dense<0xFF800000> : vector<4xf32>
    %355 = vector.multi_reduction <maximumf>, %354, %cst_406 [1] : vector<4x3xf32> to vector<4xf32>
    %356 = vector.shape_cast %355 : vector<4xf32> to vector<4x1xf32>
    %cst_407 = arith.constant 0.000000e+00 : f32
    %357 = vector.broadcast %cst_407 : f32 to vector<4x1xf32>
    %358 = arith.maximumf %356, %357 : vector<4x1xf32>
    %c0_408 = arith.constant 0 : index
    %c4_409 = arith.constant 4 : index
    %c5_410 = arith.constant 5 : index
    %c3_411 = arith.constant 3 : index
    %359 = vector.load %arg1[%c0_408, %c4_409, %c5_410, %c3_411] : memref<4x6x7x9xf32, #tpu.memory_space<vmem>>, vector<4x1x2x3xf32>
    %360 = vector.shape_cast %359 : vector<4x1x2x3xf32> to vector<4x2x3xf32>
    %c0_412 = arith.constant 0 : index
    %c5_413 = arith.constant 5 : index
    %c5_414 = arith.constant 5 : index
    %c3_415 = arith.constant 3 : index
    %361 = vector.load %arg1[%c0_412, %c5_413, %c5_414, %c3_415] : memref<4x6x7x9xf32, #tpu.memory_space<vmem>>, vector<4x1x2x3xf32>
    %362 = vector.shape_cast %361 : vector<4x1x2x3xf32> to vector<4x2x3xf32>
    %363 = arith.maximumf %360, %362 : vector<4x2x3xf32>
    %cst_416 = arith.constant dense<0xFF800000> : vector<4x3xf32>
    %364 = vector.multi_reduction <maximumf>, %363, %cst_416 [1] : vector<4x2x3xf32> to vector<4x3xf32>
    %cst_417 = arith.constant dense<0xFF800000> : vector<4xf32>
    %365 = vector.multi_reduction <maximumf>, %364, %cst_417 [1] : vector<4x3xf32> to vector<4xf32>
    %366 = vector.shape_cast %365 : vector<4xf32> to vector<4x1xf32>
    %cst_418 = arith.constant 0.000000e+00 : f32
    %367 = vector.broadcast %cst_418 : f32 to vector<4x1xf32>
    %368 = arith.maximumf %366, %367 : vector<4x1xf32>
    %c0_419 = arith.constant 0 : index
    %c4_420 = arith.constant 4 : index
    %c5_421 = arith.constant 5 : index
    %c6_422 = arith.constant 6 : index
    %369 = vector.load %arg1[%c0_419, %c4_420, %c5_421, %c6_422] : memref<4x6x7x9xf32, #tpu.memory_space<vmem>>, vector<4x1x2x3xf32>
    %370 = vector.shape_cast %369 : vector<4x1x2x3xf32> to vector<4x2x3xf32>
    %c0_423 = arith.constant 0 : index
    %c5_424 = arith.constant 5 : index
    %c5_425 = arith.constant 5 : index
    %c6_426 = arith.constant 6 : index
    %371 = vector.load %arg1[%c0_423, %c5_424, %c5_425, %c6_426] : memref<4x6x7x9xf32, #tpu.memory_space<vmem>>, vector<4x1x2x3xf32>
    %372 = vector.shape_cast %371 : vector<4x1x2x3xf32> to vector<4x2x3xf32>
    %373 = arith.maximumf %370, %372 : vector<4x2x3xf32>
    %cst_427 = arith.constant dense<0xFF800000> : vector<4x3xf32>
    %374 = vector.multi_reduction <maximumf>, %373, %cst_427 [1] : vector<4x2x3xf32> to vector<4x3xf32>
    %cst_428 = arith.constant dense<0xFF800000> : vector<4xf32>
    %375 = vector.multi_reduction <maximumf>, %374, %cst_428 [1] : vector<4x3xf32> to vector<4xf32>
    %376 = vector.shape_cast %375 : vector<4xf32> to vector<4x1xf32>
    %cst_429 = arith.constant 0.000000e+00 : f32
    %377 = vector.broadcast %cst_429 : f32 to vector<4x1xf32>
    %378 = arith.maximumf %376, %377 : vector<4x1xf32>
    %379 = tpu.concatenate %136, %146, %156, %164, %172, %180, %190, %200, %210, %220, %230, %240, %248, %256, %264, %274 in 1 : vector<4x1xf32>, vector<4x1xf32>, vector<4x1xf32>, vector<4x1xf32>, vector<4x1xf32>, vector<4x1xf32>, vector<4x1xf32>, vector<4x1xf32>, vector<4x1xf32>, vector<4x1xf32>, vector<4x1xf32>, vector<4x1xf32>, vector<4x1xf32>, vector<4x1xf32>, vector<4x1xf32>, vector<4x1xf32> -> vector<4x16xf32>
    %380 = tpu.concatenate %284, %294, %304, %314, %324, %332, %340, %348, %358, %368, %378 in 1 : vector<4x1xf32>, vector<4x1xf32>, vector<4x1xf32>, vector<4x1xf32>, vector<4x1xf32>, vector<4x1xf32>, vector<4x1xf32>, vector<4x1xf32>, vector<4x1xf32>, vector<4x1xf32>, vector<4x1xf32> -> vector<4x11xf32>
    %381 = tpu.concatenate %379, %380 in 1 : vector<4x16xf32>, vector<4x11xf32> -> vector<4x27xf32>
    %c0_430 = arith.constant 0 : index
    %c0_431 = arith.constant 0 : index
    %c0_432 = arith.constant 0 : index
    %382 = vector.load %arg4[%c0_430, %c0_431, %c0_432] : memref<1x4x27xf32, #tpu.memory_space<vmem>>, vector<1x4x27xf32>
    %383 = vector.shape_cast %382 : vector<1x4x27xf32> to vector<4x27xf32>
    %384 = vector.shape_cast %381 : vector<4x27xf32> to vector<1x4x27xf32>
    tpu.vector_store %arg4[%c0_430, %c0_431, %c0_432], %384 {strides = array<i32>} : memref<1x4x27xf32, #tpu.memory_space<vmem>>, vector<1x4x27xf32>,
    return
  }
  func.func @transform_0(%arg0: i32) -> (i32, i32, i32, i32) {
    %c0_i32 = arith.constant 0 : i32
    %c0_i32_0 = arith.constant 0 : i32
    %c0_i32_1 = arith.constant 0 : i32
    %c0_i32_2 = arith.constant 0 : i32
    return %arg0, %c0_i32, %c0_i32_0, %c0_i32_1 : i32, i32, i32, i32
  }
  func.func @transform_1(%arg0: i32) -> (i32, i32, i32) {
    %c0_i32 = arith.constant 0 : i32
    %c0_i32_0 = arith.constant 0 : i32
    %c0_i32_1 = arith.constant 0 : i32
    return %arg0, %c0_i32, %c0_i32_0 : i32, i32, i32
  }
  func.func @transform_2(%arg0: i32) -> (i32, i32, i32) {
    %c0_i32 = arith.constant 0 : i32
    %c0_i32_0 = arith.constant 0 : i32
    %c0_i32_1 = arith.constant 0 : i32
    return %arg0, %c0_i32, %c0_i32_0 : i32, i32, i32
  }
  func.func @transform_3(%arg0: i32) -> (i32, i32, i32) {
    %c0_i32 = arith.constant 0 : i32
    %c0_i32_0 = arith.constant 0 : i32
    %c0_i32_1 = arith.constant 0 : i32
    return %arg0, %c0_i32, %c0_i32_0 : i32, i32, i32
  }
}

</mosaic_0001>

<llo_original>
// kernel: tpu_custom_call.1
$region0: #{tpu_custom_call.1}
  #allocation0 [shape = 'u32[]', space=smem, size = 0x4, offset = 0x4, fixed_abs, tag = 'smem constant byte address 0x4 - core index']
  #allocation1 [shape = 'u32[144,128]{1,0:T(1,128)}', space=vmem, size = 0x12000, scoped, tag = 'internal scratch']
  %s0 = inlined_call_operand.vmem [shape: f32[8,6,7,9], index: 0, kind: input, shape index: {}]
  %s1 = inlined_call_operand.vmem [shape: f32[2,4,1], index: 1, kind: output, shape index: {0}]
  %s2 = inlined_call_operand.hbm [shape: f32[2,4,8], index: 2, kind: output, shape index: {1}]
  %s3 = inlined_call_operand.hbm [shape: f32[2,4,27], index: 3, kind: output, shape index: {2}]
  %4 = xla_tuple %s1, %s2, %s3
  %s5 = sld [smem:[#allocation0]]
  $region53: #{tpu_custom_call.1} parent=0
    _
  %s7 = ssub.s32 1, %s5
  %s8 = scalar_select 0, %s7, %s5
  $region1: #{tpu_custom_call.1} parent=0
    #allocation2 [shape = 'u8[4096]{0}', space=vmem, size = 0x1000, scoped, tag = 'output window, operand 1']
    #allocation3 [shape = 's32[2]{0}', space=sflag, size = 0x8, scoped, tag = 'scoped memory for tpu_custom_call.1']
    #allocation4 [shape = 'u8[4096]{0}', space=vmem, size = 0x1000, scoped, tag = 'output window, operand 2']
    #allocation5 [shape = 's32[2]{0}', space=sflag, size = 0x8, scoped, tag = 'scoped memory for tpu_custom_call.1']
    %9 = vsyncpa [#allocation3], 0
    %s10 = scalar_lea.sflag [#allocation3], 1
    %11 = vsyncpa %s10, 0
    %12 = vsyncpa [#allocation5], 0
    %s13 = scalar_lea.sflag [#allocation5], 1
    %14 = vsyncpa %s13, 0
    loop: start=0, step=1, limit=4
    $region2: #{tpu_custom_call.1} parent=1 // loop_pre_header
      _
    $region3: #{tpu_custom_call.1} parent=1 // loop_header
      %s16 = sphi 0, %s20
      %p17 = scmp.ge.s32.totalorder %s16, 4
      %s26 = sphi 0, %s28
      %s29 = sphi 0, %s26
      %s30 = sphi 0, %s29
      %s46 = sphi 0, %s30
      %s52 = sphi 0, %s54
      %s55 = sphi 0, %s52
      %s56 = sphi 0, %s55
      %s72 = sphi 0, %s56
      %s78 = sphi 0, %s80
      %s81 = sphi 0, %s78
      %s82 = sphi 0, %s81
      %s98 = sphi 0, %s82
      %s104 = sphi 0, %s106
      %s107 = sphi 0, %s104
      %s108 = sphi 0, %s107
      %s124 = sphi 0, %s108
    $region4: #{tpu_custom_call.1} parent=1 // loop_header_branch
      %19 = sbr.rel (%p17) target = $region8
    $region5: #{tpu_custom_call.1} parent=1 // loop_body
      %s21 = ssub.s32 %s16, 1
      %s22 = ssub.s32 %s16, 2
      %s23 = sadd.s32 %s16, 1
      %s24 = ssub.s32 %s16, %s23
      %p25 = scmp.eq.s32.totalorder %s24, 0
      %s27 = sadd.s32 %s26, 1
      %s28 = scalar_select %p25, %s26, %s27
      %p31 = pneg %p25
      %p32 = scmp.eq.s32.totalorder %s16, 1
      %p33 = por %p31, %p32
      %p34 = scmp.ne.s32.totalorder %s26, %s29
      %p35 = scmp.eq.s32.totalorder %s16, 0
      %p36 = por %p34, %p35
      %p37 = scmp.ne.s32.totalorder %s26, %s29
      %p38 = scmp.eq.s32.totalorder %s21, 1
      %p39 = por %p37, %p38
      %p40 = scmp.ne.s32.totalorder %s29, %s30
      %p41 = scmp.eq.s32.totalorder %s21, 0
      %p42 = por %p40, %p41
      %p43 = scmp.ne.s32.totalorder %s29, %s30
      %p44 = scmp.eq.s32.totalorder %s22, 1
      %p45 = por %p43, %p44
      %p47 = scmp.ne.s32.totalorder %s30, %s46
      %p48 = scmp.eq.s32.totalorder %s22, 0
      %p49 = por %p47, %p48
      %s50 = ssub.s32 %s16, %s23
      %p51 = scmp.eq.s32.totalorder %s50, 0
      %s53 = sadd.s32 %s52, 1
      %s54 = scalar_select %p51, %s52, %s53
      %p57 = pneg %p51
      %p58 = scmp.eq.s32.totalorder %s16, 1
      %p59 = por %p57, %p58
      %p60 = scmp.ne.s32.totalorder %s52, %s55
      %p61 = scmp.eq.s32.totalorder %s16, 0
      %p62 = por %p60, %p61
      %p63 = scmp.ne.s32.totalorder %s52, %s55
      %p64 = scmp.eq.s32.totalorder %s21, 1
      %p65 = por %p63, %p64
      %p66 = scmp.ne.s32.totalorder %s55, %s56
      %p67 = scmp.eq.s32.totalorder %s21, 0
      %p68 = por %p66, %p67
      %p69 = scmp.ne.s32.totalorder %s55, %s56
      %p70 = scmp.eq.s32.totalorder %s22, 1
      %p71 = por %p69, %p70
      %p73 = scmp.ne.s32.totalorder %s56, %s72
      %p74 = scmp.eq.s32.totalorder %s22, 0
      %p75 = por %p73, %p74
      %s76 = ssub.s32 %s16, %s23
      %p77 = scmp.eq.s32.totalorder %s76, 0
      %s79 = sadd.s32 %s78, 1
      %s80 = scalar_select %p77, %s78, %s79
      %p83 = pneg %p77
      %p84 = scmp.eq.s32.totalorder %s16, 1
      %p85 = por %p83, %p84
      %p86 = scmp.ne.s32.totalorder %s78, %s81
      %p87 = scmp.eq.s32.totalorder %s16, 0
      %p88 = por %p86, %p87
      %p89 = scmp.ne.s32.totalorder %s78, %s81
      %p90 = scmp.eq.s32.totalorder %s21, 1
      %p91 = por %p89, %p90
      %p92 = scmp.ne.s32.totalorder %s81, %s82
      %p93 = scmp.eq.s32.totalorder %s21, 0
      %p94 = por %p92, %p93
      %p95 = scmp.ne.s32.totalorder %s81, %s82
      %p96 = scmp.eq.s32.totalorder %s22, 1
      %p97 = por %p95, %p96
      %p99 = scmp.ne.s32.totalorder %s82, %s98
      %p100 = scmp.eq.s32.totalorder %s22, 0
      %p101 = por %p99, %p100
      %s102 = ssub.s32 %s16, %s23
      %p103 = scmp.eq.s32.totalorder %s102, 0
      %s105 = sadd.s32 %s104, 1
      %s106 = scalar_select %p103, %s104, %s105
      %p109 = pneg %p103
      %p110 = scmp.eq.s32.totalorder %s16, 1
      %p111 = por %p109, %p110
      %p112 = scmp.ne.s32.totalorder %s104, %s107
      %p113 = scmp.eq.s32.totalorder %s16, 0
      %p114 = por %p112, %p113
      %p115 = scmp.ne.s32.totalorder %s104, %s107
      %p116 = scmp.eq.s32.totalorder %s21, 1
      %p117 = por %p115, %p116
      %p118 = scmp.ne.s32.totalorder %s107, %s108
      %p119 = scmp.eq.s32.totalorder %s21, 0
      %p120 = por %p118, %p119
      %p121 = scmp.ne.s32.totalorder %s107, %s108
      %p122 = scmp.eq.s32.totalorder %s22, 1
      %p123 = por %p121, %p122
      %p125 = scmp.ne.s32.totalorder %s108, %s124
      %p126 = scmp.eq.s32.totalorder %s22, 0
      %p127 = por %p125, %p126
      %p128 = scmp.le.s32.totalorder 1, %s16
      %p129 = scmp.lt.s32.totalorder %s16, 3
      %p130 = pnand %p128, %p129
      %p131 = pneg %p130
      // Predicated region
      $region9: #{tpu_custom_call.1} parent=5 // pred_check
        _
      $region10: #{tpu_custom_call.1} parent=5 // pred_check_branch
        %133 = sbr.rel (%p130) target = $region12
      $region11: #{tpu_custom_call.1} parent=5 // pred_region
        %s134 = ssub.s32 %s16, 1
      $region12: #{tpu_custom_call.1} parent=5 // pred_fallthru
        _
      %p135 = scmp.lt.s32.totalorder %s16, 2
      // Predicated region
      $region13: #{tpu_custom_call.1} parent=5 // pred_check
        %p136 = pneg %p135
      $region14: #{tpu_custom_call.1} parent=5 // pred_check_branch
        %138 = sbr.rel (%p136) target = $region16
      $region15: #{tpu_custom_call.1} parent=5 // pred_region
        // Predicated region
        $region17: #{tpu_custom_call.1} parent=15 // pred_check
          %p139 = pneg %p36
        $region18: #{tpu_custom_call.1} parent=15 // pred_check_branch
          %141 = sbr.rel (%p139) target = $region20
        $region19: #{tpu_custom_call.1} parent=15 // pred_region
          %s142 = smul.u32 4, %s16
          %p143 = scmp.lt.s32.totalorder %s142, 7
          %s144 = scalar_select %p143, %s142, 7
          %s145 = smul.addr %s144, 6
          %s146 = smul.addr %s145, 8
          %s147 = scalar_lea.vmem %s0, %s146
          %s148 = smul.u32 4, %s16
        $region20: #{tpu_custom_call.1} parent=15 // pred_fallthru
          _
      $region16: #{tpu_custom_call.1} parent=5 // pred_fallthru
        _
      %p149 = scmp.le.s32.totalorder 1, %s16
      %p150 = scmp.lt.s32.totalorder %s16, 3
      %p151 = pnand %p149, %p150
      %p152 = pneg %p151
      // Predicated region
      $region21: #{tpu_custom_call.1} parent=5 // pred_check
        _
      $region22: #{tpu_custom_call.1} parent=5 // pred_check_branch
        %154 = sbr.rel (%p151) target = $region24
      $region23: #{tpu_custom_call.1} parent=5 // pred_region
        %s155 = ssub.s32 %s16, 1
        %s156 = smul.u32 4, %s21
        %p157 = scmp.lt.s32.totalorder %s156, 7
        %s158 = scalar_select %p157, %s156, 7
        %s159 = smul.addr %s158, 6
        %s160 = smul.addr %s159, 8
        %s161 = scalar_lea.vmem %s0, %s160
        %p162 = pneg %p42
        %p163 = pneg %p39
        %p164 = pneg %p68
        %p165 = pneg %p65
        %p166 = scmp.lt.s32.totalorder %s21, 1
        %s167 = scalar_select %p166, %s21, 1
        %s168 = smul.addr %s167, 4
        %s169 = scalar_lea.vmem %s1, %s168
        %p170 = pneg %p94
        %p171 = pneg %p91
        %s172 = sand.u32 %s81, 1
        %s173 = scalar_lea.sflag [#allocation3], %s172
        %s174 = sand.u32 %s81, 1
        %s175 = smul.addr %s174, 4
        %s176 = scalar_lea.vmem [#allocation2], %s175
        %p177 = pneg %p120
        %p178 = pneg %p117
        %s179 = sand.u32 %s107, 1
        %s180 = scalar_lea.sflag [#allocation5], %s179
        %s181 = sand.u32 %s107, 1
        %s182 = smul.addr %s181, 4
        %s183 = scalar_lea.vmem [#allocation4], %s182
        %s184 = smul.u32 4, %s21
        %p185 = scmp.lt.s32.totalorder %s184, 7
        %s186 = scalar_select %p185, %s184, 7
        %s187 = smul.addr %s186, 6
        %s188 = smul.addr %s187, 8
        %s189 = scalar_lea.vmem %s0, %s188
        %s190 = smul.u32 4, %s21
        %p191 = scmp.lt.s32.totalorder %s21, 1
        %s192 = scalar_select %p191, %s21, 1
        %s193 = smul.addr %s192, 4
        %s194 = scalar_lea.vmem %s1, %s193
        %v195 = vld [vmem:[%s189] sm:$0x7f]
        %v196 = vld [vmem:[%s189 + $0x30] sm:$0x7f]
        %v197 = vld [vmem:[%s189 + $0x60] sm:$0x7f]
        %v198 = vld [vmem:[%s189 + $0x90] sm:$0x7f]
        %s199 = scalar_lea.vmem %s189, 8
        %v200 = vld [vmem:[%s199] sm:$0x7f]
        %v201 = vld [vmem:[%s199 + $0x30] sm:$0x7f]
        %v202 = vld [vmem:[%s199 + $0x60] sm:$0x7f]
        %v203 = vld [vmem:[%s199 + $0x90] sm:$0x7f]
        %v204 = vmax.f32 %v195, %v200
        %v205 = vmax.f32 %v196, %v201
        %v206 = vmax.f32 %v197, %v202
        %v207 = vmax.f32 %v198, %v203
        %s208 = scalar_lea.vmem %s189, 16
        %v209 = vld [vmem:[%s208] sm:$0x7f]
        %v210 = vld [vmem:[%s208 + $0x30] sm:$0x7f]
        %v211 = vld [vmem:[%s208 + $0x60] sm:$0x7f]
        %v212 = vld [vmem:[%s208 + $0x90] sm:$0x7f]
        %v213 = vmax.f32 %v204, %v209
        %v214 = vmax.f32 %v205, %v210
        %v215 = vmax.f32 %v206, %v211
        %v216 = vmax.f32 %v207, %v212
        %s217 = scalar_lea.vmem %s189, 24
        %v218 = vld [vmem:[%s217] sm:$0x7f]
        %v219 = vld [vmem:[%s217 + $0x30] sm:$0x7f]
        %v220 = vld [vmem:[%s217 + $0x60] sm:$0x7f]
        %v221 = vld [vmem:[%s217 + $0x90] sm:$0x7f]
        %v222 = vmax.f32 %v213, %v218
        %v223 = vmax.f32 %v214, %v219
        %v224 = vmax.f32 %v215, %v220
        %v225 = vmax.f32 %v216, %v221
        %s226 = scalar_lea.vmem %s189, 32
        %v227 = vld [vmem:[%s226] sm:$0x7f]
        %v228 = vld [vmem:[%s226 + $0x30] sm:$0x7f]
        %v229 = vld [vmem:[%s226 + $0x60] sm:$0x7f]
        %v230 = vld [vmem:[%s226 + $0x90] sm:$0x7f]
        %v231 = vmax.f32 %v222, %v227
        %v232 = vmax.f32 %v223, %v228
        %v233 = vmax.f32 %v224, %v229
        %v234 = vmax.f32 %v225, %v230
        %s235 = scalar_lea.vmem %s189, 40
        %v236 = vld [vmem:[%s235] sm:$0x7f]
        %v237 = vld [vmem:[%s235 + $0x30] sm:$0x7f]
        %v238 = vld [vmem:[%s235 + $0x60] sm:$0x7f]
        %v239 = vld [vmem:[%s235 + $0x90] sm:$0x7f]
        %v240 = vmax.f32 %v231, %v236
        %v241 = vmax.f32 %v232, %v237
        %v242 = vmax.f32 %v233, %v238
        %v243 = vmax.f32 %v234, %v239
        %vm244 = vcmask 71680
        %v245 = vsel %vm244, %v240, -inf
        %v246 = vrot.slane %v245, 4
        %v247 = vmax.f32 %v245, %v246
        %v248 = vrot.slane %v247, 2
        %v249 = vmax.f32 %v247, %v248
        %v250 = vrot.slane %v249, 1
        %v251 = vmax.f32 %v249, %v250
        %v252 = vsel %vm244, %v241, -inf
        %v253 = vrot.slane %v252, 4
        %v254 = vmax.f32 %v252, %v253
        %v255 = vrot.slane %v254, 2
        %v256 = vmax.f32 %v254, %v255
        %v257 = vrot.slane %v256, 1
        %v258 = vmax.f32 %v256, %v257
        %v259 = vsel %vm244, %v242, -inf
        %v260 = vrot.slane %v259, 4
        %v261 = vmax.f32 %v259, %v260
        %v262 = vrot.slane %v261, 2
        %v263 = vmax.f32 %v261, %v262
        %v264 = vrot.slane %v263, 1
        %v265 = vmax.f32 %v263, %v264
        %v266 = vsel %vm244, %v243, -inf
        %v267 = vrot.slane %v266, 4
        %v268 = vmax.f32 %v266, %v267
        %v269 = vrot.slane %v268, 2
        %v270 = vmax.f32 %v268, %v269
        %v271 = vrot.slane %v270, 1
        %v272 = vmax.f32 %v270, %v271
        %vm277 = vcmask 1041409
        %v278 = vsel %vm277, %v258, %v251
        %vm279 = vcmask 1042434
        %v280 = vsel %vm279, %v265, %v278
        %vm281 = vcmask 1043459
        %v282 = vsel %vm281, %v272, %v280
        %vm284 = vcmask 68608
        %v285 = vsel %vm284, %v282, -inf
        %286 = vmax.xlane.f32.xlu0 %v285
        %v287 = vpop.xlane.xlu0 %286
        %vm288 = vcmask 3072
        %289 = vst.msk [vmem:[%s194] sm:$0xf] %vm288, %v287
        %v290 = vld [vmem:[%s189] sm:$0xf]
        %v291 = vld [vmem:[%s189 + $0x30] sm:$0xf]
        %v292 = vld [vmem:[%s189 + $0x60] sm:$0xf]
        %v293 = vld [vmem:[%s189 + $0x90] sm:$0xf]
        %v294 = vld [vmem:[%s199] sm:$0xf]
        %v295 = vld [vmem:[%s199 + $0x30] sm:$0xf]
        %v296 = vld [vmem:[%s199 + $0x60] sm:$0xf]
        %v297 = vld [vmem:[%s199 + $0x90] sm:$0xf]
        %v298 = vmax.f32 %v290, %v294
        %v299 = vmax.f32 %v291, %v295
        %v300 = vmax.f32 %v292, %v296
        %v301 = vmax.f32 %v293, %v297
        %v302 = vld [vmem:[%s208] sm:$0xf]
        %v303 = vld [vmem:[%s208 + $0x30] sm:$0xf]
        %v304 = vld [vmem:[%s208 + $0x60] sm:$0xf]
        %v305 = vld [vmem:[%s208 + $0x90] sm:$0xf]
        %v306 = vmax.f32 %v298, %v302
        %v307 = vmax.f32 %v299, %v303
        %v308 = vmax.f32 %v300, %v304
        %v309 = vmax.f32 %v301, %v305
        %vm310 = vcmask 35840
        %v311 = vsel %vm310, %v306, -inf
        %v312 = vrot.slane %v311, 4
        %v313 = vmax.f32 %v311, %v312
        %v314 = vrot.slane %v313, 2
        %v315 = vmax.f32 %v313, %v314
        %v316 = vrot.slane %v315, 1
        %v317 = vmax.f32 %v315, %v316
        %v318 = vsel %vm310, %v307, -inf
        %v319 = vrot.slane %v318, 4
        %v320 = vmax.f32 %v318, %v319
        %v321 = vrot.slane %v320, 2
        %v322 = vmax.f32 %v320, %v321
        %v323 = vrot.slane %v322, 1
        %v324 = vmax.f32 %v322, %v323
        %v325 = vsel %vm310, %v308, -inf
        %v326 = vrot.slane %v325, 4
        %v327 = vmax.f32 %v325, %v326
        %v328 = vrot.slane %v327, 2
        %v329 = vmax.f32 %v327, %v328
        %v330 = vrot.slane %v329, 1
        %v331 = vmax.f32 %v329, %v330
        %v332 = vsel %vm310, %v309, -inf
        %v333 = vrot.slane %v332, 4
        %v334 = vmax.f32 %v332, %v333
        %v335 = vrot.slane %v334, 2
        %v336 = vmax.f32 %v334, %v335
        %v337 = vrot.slane %v336, 1
        %v338 = vmax.f32 %v336, %v337
        %v343 = vsel %vm277, %v324, %v317
        %v344 = vsel %vm279, %v331, %v343
        %v345 = vsel %vm281, %v338, %v344
        %v347 = vsel %vm310, %v345, -inf
        %348 = vmax.xlane.f32.xlu0 %v347
        %v349 = vpop.xlane.xlu0 %348
        %vm350 = vcmask 68648
        %v351 = vsel %vm350, %v306, -inf
        %v352 = vrot.slane %v351, 4
        %v353 = vmax.f32 %v351, %v352
        %v354 = vrot.slane %v353, 2
        %v355 = vmax.f32 %v353, %v354
        %v356 = vrot.slane %v355, 1
        %v357 = vmax.f32 %v355, %v356
        %v358 = vsel %vm350, %v307, -inf
        %v359 = vrot.slane %v358, 4
        %v360 = vmax.f32 %v358, %v359
        %v361 = vrot.slane %v360, 2
        %v362 = vmax.f32 %v360, %v361
        %v363 = vrot.slane %v362, 1
        %v364 = vmax.f32 %v362, %v363
        %v365 = vsel %vm350, %v308, -inf
        %v366 = vrot.slane %v365, 4
        %v367 = vmax.f32 %v365, %v366
        %v368 = vrot.slane %v367, 2
        %v369 = vmax.f32 %v367, %v368
        %v370 = vrot.slane %v369, 1
        %v371 = vmax.f32 %v369, %v370
        %v372 = vsel %vm350, %v309, -inf
        %v373 = vrot.slane %v372, 4
        %v374 = vmax.f32 %v372, %v373
        %v375 = vrot.slane %v374, 2
        %v376 = vmax.f32 %v374, %v375
        %v377 = vrot.slane %v376, 1
        %v378 = vmax.f32 %v376, %v377
        %v383 = vsel %vm277, %v364, %v357
        %v384 = vsel %vm279, %v371, %v383
        %v385 = vsel %vm281, %v378, %v384
        %v387 = vsel %vm350, %v385, -inf
        %388 = vmax.xlane.f32.xlu0 %v387
        %v389 = vpop.xlane.xlu0 %388
        %v390 = vmax.f32 %v389, 0.0
        %v391 = vld [vmem:[%s189 + $0x4] sm:$0x7]
        %v392 = vld [vmem:[%s189 + $0x34] sm:$0x7]
        %v393 = vld [vmem:[%s189 + $0x64] sm:$0x7]
        %v394 = vld [vmem:[%s189 + $0x94] sm:$0x7]
        %v395 = vld [vmem:[%s199 + $0x4] sm:$0x7]
        %v396 = vld [vmem:[%s199 + $0x34] sm:$0x7]
        %v397 = vld [vmem:[%s199 + $0x64] sm:$0x7]
        %v398 = vld [vmem:[%s199 + $0x94] sm:$0x7]
        %v399 = vmax.f32 %v391, %v395
        %v400 = vmax.f32 %v392, %v396
        %v401 = vmax.f32 %v393, %v397
        %v402 = vmax.f32 %v394, %v398
        %v403 = vld [vmem:[%s208 + $0x4] sm:$0x7]
        %v404 = vld [vmem:[%s208 + $0x34] sm:$0x7]
        %v405 = vld [vmem:[%s208 + $0x64] sm:$0x7]
        %v406 = vld [vmem:[%s208 + $0x94] sm:$0x7]
        %v407 = vmax.f32 %v399, %v403
        %v408 = vmax.f32 %v400, %v404
        %v409 = vmax.f32 %v401, %v405
        %v410 = vmax.f32 %v402, %v406
        %vm411 = vcmask 34816
        %v412 = vsel %vm411, %v407, -inf
        %v413 = vrot.slane %v412, 4
        %v414 = vmax.f32 %v412, %v413
        %v415 = vrot.slane %v414, 2
        %v416 = vmax.f32 %v414, %v415
        %v417 = vrot.slane %v416, 1
        %v418 = vmax.f32 %v416, %v417
        %v419 = vsel %vm411, %v408, -inf
        %v420 = vrot.slane %v419, 4
        %v421 = vmax.f32 %v419, %v420
        %v422 = vrot.slane %v421, 2
        %v423 = vmax.f32 %v421, %v422
        %v424 = vrot.slane %v423, 1
        %v425 = vmax.f32 %v423, %v424
        %v426 = vsel %vm411, %v409, -inf
        %v427 = vrot.slane %v426, 4
        %v428 = vmax.f32 %v426, %v427
        %v429 = vrot.slane %v428, 2
        %v430 = vmax.f32 %v428, %v429
        %v431 = vrot.slane %v430, 1
        %v432 = vmax.f32 %v430, %v431
        %v433 = vsel %vm411, %v410, -inf
        %v434 = vrot.slane %v433, 4
        %v435 = vmax.f32 %v433, %v434
        %v436 = vrot.slane %v435, 2
        %v437 = vmax.f32 %v435, %v436
        %v438 = vrot.slane %v437, 1
        %v439 = vmax.f32 %v437, %v438
        %v444 = vsel %vm277, %v425, %v418
        %v445 = vsel %vm279, %v432, %v444
        %v446 = vsel %vm281, %v439, %v445
        %v448 = vsel %vm310, %v446, -inf
        %449 = vmax.xlane.f32.xlu0 %v448
        %v450 = vpop.xlane.xlu0 %449
        %v451 = vmax.f32 %v450, 0.0
        %vm452 = vcmask 67624
        %v453 = vsel %vm452, %v407, -inf
        %v454 = vrot.slane %v453, 4
        %v455 = vmax.f32 %v453, %v454
        %v456 = vrot.slane %v455, 2
        %v457 = vmax.f32 %v455, %v456
        %v458 = vrot.slane %v457, 1
        %v459 = vmax.f32 %v457, %v458
        %v460 = vsel %vm452, %v408, -inf
        %v461 = vrot.slane %v460, 4
        %v462 = vmax.f32 %v460, %v461
        %v463 = vrot.slane %v462, 2
        %v464 = vmax.f32 %v462, %v463
        %v465 = vrot.slane %v464, 1
        %v466 = vmax.f32 %v464, %v465
        %v467 = vsel %vm452, %v409, -inf
        %v468 = vrot.slane %v467, 4
        %v469 = vmax.f32 %v467, %v468
        %v470 = vrot.slane %v469, 2
        %v471 = vmax.f32 %v469, %v470
        %v472 = vrot.slane %v471, 1
        %v473 = vmax.f32 %v471, %v472
        %v474 = vsel %vm452, %v410, -inf
        %v475 = vrot.slane %v474, 4
        %v476 = vmax.f32 %v474, %v475
        %v477 = vrot.slane %v476, 2
        %v478 = vmax.f32 %v476, %v477
        %v479 = vrot.slane %v478, 1
        %v480 = vmax.f32 %v478, %v479
        %v485 = vsel %vm277, %v466, %v459
        %v486 = vsel %vm279, %v473, %v485
        %v487 = vsel %vm281, %v480, %v486
        %v489 = vsel %vm350, %v487, -inf
        %490 = vmax.xlane.f32.xlu0 %v489
        %v491 = vpop.xlane.xlu0 %490
        %v492 = vmax.f32 %v491, 0.0
        %v493 = vld [vmem:[%s217] sm:$0xf]
        %v494 = vld [vmem:[%s217 + $0x30] sm:$0xf]
        %v495 = vld [vmem:[%s217 + $0x60] sm:$0xf]
        %v496 = vld [vmem:[%s217 + $0x90] sm:$0xf]
        %v497 = vld [vmem:[%s226] sm:$0xf]
        %v498 = vld [vmem:[%s226 + $0x30] sm:$0xf]
        %v499 = vld [vmem:[%s226 + $0x60] sm:$0xf]
        %v500 = vld [vmem:[%s226 + $0x90] sm:$0xf]
        %v501 = vmax.f32 %v493, %v497
        %v502 = vmax.f32 %v494, %v498
        %v503 = vmax.f32 %v495, %v499
        %v504 = vmax.f32 %v496, %v500
        %v505 = vld [vmem:[%s235] sm:$0xf]
        %v506 = vld [vmem:[%s235 + $0x30] sm:$0xf]
        %v507 = vld [vmem:[%s235 + $0x60] sm:$0xf]
        %v508 = vld [vmem:[%s235 + $0x90] sm:$0xf]
        %v509 = vmax.f32 %v501, %v505
        %v510 = vmax.f32 %v502, %v506
        %v511 = vmax.f32 %v503, %v507
        %v512 = vmax.f32 %v504, %v508
        %v513 = vsel %vm310, %v509, -inf
        %v514 = vrot.slane %v513, 4
        %v515 = vmax.f32 %v513, %v514
        %v516 = vrot.slane %v515, 2
        %v517 = vmax.f32 %v515, %v516
        %v518 = vrot.slane %v517, 1
        %v519 = vmax.f32 %v517, %v518
        %v520 = vsel %vm310, %v510, -inf
        %v521 = vrot.slane %v520, 4
        %v522 = vmax.f32 %v520, %v521
        %v523 = vrot.slane %v522, 2
        %v524 = vmax.f32 %v522, %v523
        %v525 = vrot.slane %v524, 1
        %v526 = vmax.f32 %v524, %v525
        %v527 = vsel %vm310, %v511, -inf
        %v528 = vrot.slane %v527, 4
        %v529 = vmax.f32 %v527, %v528
        %v530 = vrot.slane %v529, 2
        %v531 = vmax.f32 %v529, %v530
        %v532 = vrot.slane %v531, 1
        %v533 = vmax.f32 %v531, %v532
        %v534 = vsel %vm310, %v512, -inf
        %v535 = vrot.slane %v534, 4
        %v536 = vmax.f32 %v534, %v535
        %v537 = vrot.slane %v536, 2
        %v538 = vmax.f32 %v536, %v537
        %v539 = vrot.slane %v538, 1
        %v540 = vmax.f32 %v538, %v539
        %v545 = vsel %vm277, %v526, %v519
        %v546 = vsel %vm279, %v533, %v545
        %v547 = vsel %vm281, %v540, %v546
        %v549 = vsel %vm310, %v547, -inf
        %550 = vmax.xlane.f32.xlu0 %v549
        %v551 = vpop.xlane.xlu0 %550
        %v552 = vsel %vm350, %v509, -inf
        %v553 = vrot.slane %v552, 4
        %v554 = vmax.f32 %v552, %v553
        %v555 = vrot.slane %v554, 2
        %v556 = vmax.f32 %v554, %v555
        %v557 = vrot.slane %v556, 1
        %v558 = vmax.f32 %v556, %v557
        %v559 = vsel %vm350, %v510, -inf
        %v560 = vrot.slane %v559, 4
        %v561 = vmax.f32 %v559, %v560
        %v562 = vrot.slane %v561, 2
        %v563 = vmax.f32 %v561, %v562
        %v564 = vrot.slane %v563, 1
        %v565 = vmax.f32 %v563, %v564
        %v566 = vsel %vm350, %v511, -inf
        %v567 = vrot.slane %v566, 4
        %v568 = vmax.f32 %v566, %v567
        %v569 = vrot.slane %v568, 2
        %v570 = vmax.f32 %v568, %v569
        %v571 = vrot.slane %v570, 1
        %v572 = vmax.f32 %v570, %v571
        %v573 = vsel %vm350, %v512, -inf
        %v574 = vrot.slane %v573, 4
        %v575 = vmax.f32 %v573, %v574
        %v576 = vrot.slane %v575, 2
        %v577 = vmax.f32 %v575, %v576
        %v578 = vrot.slane %v577, 1
        %v579 = vmax.f32 %v577, %v578
        %v584 = vsel %vm277, %v565, %v558
        %v585 = vsel %vm279, %v572, %v584
        %v586 = vsel %vm281, %v579, %v585
        %v588 = vsel %vm350, %v586, -inf
        %589 = vmax.xlane.f32.xlu0 %v588
        %v590 = vpop.xlane.xlu0 %589
        %v591 = vmax.f32 %v590, 0.0
        %v592 = vld [vmem:[%s217 + $0x4] sm:$0x7]
        %v593 = vld [vmem:[%s217 + $0x34] sm:$0x7]
        %v594 = vld [vmem:[%s217 + $0x64] sm:$0x7]
        %v595 = vld [vmem:[%s217 + $0x94] sm:$0x7]
        %v596 = vld [vmem:[%s226 + $0x4] sm:$0x7]
        %v597 = vld [vmem:[%s226 + $0x34] sm:$0x7]
        %v598 = vld [vmem:[%s226 + $0x64] sm:$0x7]
        %v599 = vld [vmem:[%s226 + $0x94] sm:$0x7]
        %v600 = vmax.f32 %v592, %v596
        %v601 = vmax.f32 %v593, %v597
        %v602 = vmax.f32 %v594, %v598
        %v603 = vmax.f32 %v595, %v599
        %v604 = vld [vmem:[%s235 + $0x4] sm:$0x7]
        %v605 = vld [vmem:[%s235 + $0x34] sm:$0x7]
        %v606 = vld [vmem:[%s235 + $0x64] sm:$0x7]
        %v607 = vld [vmem:[%s235 + $0x94] sm:$0x7]
        %v608 = vmax.f32 %v600, %v604
        %v609 = vmax.f32 %v601, %v605
        %v610 = vmax.f32 %v602, %v606
        %v611 = vmax.f32 %v603, %v607
        %v612 = vsel %vm411, %v608, -inf
        %v613 = vrot.slane %v612, 4
        %v614 = vmax.f32 %v612, %v613
        %v615 = vrot.slane %v614, 2
        %v616 = vmax.f32 %v614, %v615
        %v617 = vrot.slane %v616, 1
        %v618 = vmax.f32 %v616, %v617
        %v619 = vsel %vm411, %v609, -inf
        %v620 = vrot.slane %v619, 4
        %v621 = vmax.f32 %v619, %v620
        %v622 = vrot.slane %v621, 2
        %v623 = vmax.f32 %v621, %v622
        %v624 = vrot.slane %v623, 1
        %v625 = vmax.f32 %v623, %v624
        %v626 = vsel %vm411, %v610, -inf
        %v627 = vrot.slane %v626, 4
        %v628 = vmax.f32 %v626, %v627
        %v629 = vrot.slane %v628, 2
        %v630 = vmax.f32 %v628, %v629
        %v631 = vrot.slane %v630, 1
        %v632 = vmax.f32 %v630, %v631
        %v633 = vsel %vm411, %v611, -inf
        %v634 = vrot.slane %v633, 4
        %v635 = vmax.f32 %v633, %v634
        %v636 = vrot.slane %v635, 2
        %v637 = vmax.f32 %v635, %v636
        %v638 = vrot.slane %v637, 1
        %v639 = vmax.f32 %v637, %v638
        %v644 = vsel %vm277, %v625, %v618
        %v645 = vsel %vm279, %v632, %v644
        %v646 = vsel %vm281, %v639, %v645
        %v648 = vsel %vm310, %v646, -inf
        %649 = vmax.xlane.f32.xlu0 %v648
        %v650 = vpop.xlane.xlu0 %649
        %v651 = vmax.f32 %v650, 0.0
        %v652 = vsel %vm452, %v608, -inf
        %v653 = vrot.slane %v652, 4
        %v654 = vmax.f32 %v652, %v653
        %v655 = vrot.slane %v654, 2
        %v656 = vmax.f32 %v654, %v655
        %v657 = vrot.slane %v656, 1
        %v658 = vmax.f32 %v656, %v657
        %v659 = vsel %vm452, %v609, -inf
        %v660 = vrot.slane %v659, 4
        %v661 = vmax.f32 %v659, %v660
        %v662 = vrot.slane %v661, 2
        %v663 = vmax.f32 %v661, %v662
        %v664 = vrot.slane %v663, 1
        %v665 = vmax.f32 %v663, %v664
        %v666 = vsel %vm452, %v610, -inf
        %v667 = vrot.slane %v666, 4
        %v668 = vmax.f32 %v666, %v667
        %v669 = vrot.slane %v668, 2
        %v670 = vmax.f32 %v668, %v669
        %v671 = vrot.slane %v670, 1
        %v672 = vmax.f32 %v670, %v671
        %v673 = vsel %vm452, %v611, -inf
        %v674 = vrot.slane %v673, 4
        %v675 = vmax.f32 %v673, %v674
        %v676 = vrot.slane %v675, 2
        %v677 = vmax.f32 %v675, %v676
        %v678 = vrot.slane %v677, 1
        %v679 = vmax.f32 %v677, %v678
        %v684 = vsel %vm277, %v665, %v658
        %v685 = vsel %vm279, %v672, %v684
        %v686 = vsel %vm281, %v679, %v685
        %v688 = vsel %vm350, %v686, -inf
        %689 = vmax.xlane.f32.xlu0 %v688
        %v690 = vpop.xlane.xlu0 %689
        %v691 = vmax.f32 %v690, 0.0
        %vm692 = vcmask 7168
        %v693 = vsel %vm692, %v349, %v390
        %vm694 = vcmask 15360
        %v695 = vsel %vm694, %v693, %v451
        %vm696 = vcmask 23552
        %v697 = vsel %vm696, %v695, %v492
        %vm698 = vcmask 31744
        %v699 = vsel %vm698, %v697, %v551
        %vm700 = vcmask 39936
        %v701 = vsel %vm700, %v699, %v591
        %vm702 = vcmask 48128
        %v703 = vsel %vm702, %v701, %v651
        %vm704 = vcmask 56320
        %v705 = vsel %vm704, %v703, %v691
        %vm706 = vcmask 60416
        %707 = vst.msk [vmem:[%s176] sm:$0xf] %vm706, %v705
        %v708 = vld [vmem:[%s189] sm:$0x3]
        %v709 = vld [vmem:[%s189 + $0x30] sm:$0x3]
        %v710 = vld [vmem:[%s189 + $0x60] sm:$0x3]
        %v711 = vld [vmem:[%s189 + $0x90] sm:$0x3]
        %v712 = vld [vmem:[%s199] sm:$0x3]
        %v713 = vld [vmem:[%s199 + $0x30] sm:$0x3]
        %v714 = vld [vmem:[%s199 + $0x60] sm:$0x3]
        %v715 = vld [vmem:[%s199 + $0x90] sm:$0x3]
        %v716 = vmax.f32 %v708, %v712
        %v717 = vmax.f32 %v709, %v713
        %v718 = vmax.f32 %v710, %v714
        %v719 = vmax.f32 %v711, %v715
        %vm720 = vcmask 17408
        %v721 = vsel %vm720, %v716, -inf
        %v722 = vrot.slane %v721, 4
        %v723 = vmax.f32 %v721, %v722
        %v724 = vrot.slane %v723, 2
        %v725 = vmax.f32 %v723, %v724
        %v726 = vrot.slane %v725, 1
        %v727 = vmax.f32 %v725, %v726
        %v728 = vsel %vm720, %v717, -inf
        %v729 = vrot.slane %v728, 4
        %v730 = vmax.f32 %v728, %v729
        %v731 = vrot.slane %v730, 2
        %v732 = vmax.f32 %v730, %v731
        %v733 = vrot.slane %v732, 1
        %v734 = vmax.f32 %v732, %v733
        %v735 = vsel %vm720, %v718, -inf
        %v736 = vrot.slane %v735, 4
        %v737 = vmax.f32 %v735, %v736
        %v738 = vrot.slane %v737, 2
        %v739 = vmax.f32 %v737, %v738
        %v740 = vrot.slane %v739, 1
        %v741 = vmax.f32 %v739, %v740
        %v742 = vsel %vm720, %v719, -inf
        %v743 = vrot.slane %v742, 4
        %v744 = vmax.f32 %v742, %v743
        %v745 = vrot.slane %v744, 2
        %v746 = vmax.f32 %v744, %v745
        %v747 = vrot.slane %v746, 1
        %v748 = vmax.f32 %v746, %v747
        %v753 = vsel %vm277, %v734, %v727
        %v754 = vsel %vm279, %v741, %v753
        %v755 = vsel %vm281, %v748, %v754
        %vm757 = vcmask 19456
        %v758 = vsel %vm757, %v755, -inf
        %759 = vmax.xlane.f32.xlu0 %v758
        %v760 = vpop.xlane.xlu0 %759
        %v761 = vmax.f32 %v760, 0.0
        %vm762 = vcmask 42008
        %v763 = vsel %vm762, %v716, -inf
        %v764 = vrot.slane %v763, 4
        %v765 = vmax.f32 %v763, %v764
        %v766 = vrot.slane %v765, 2
        %v767 = vmax.f32 %v765, %v766
        %v768 = vrot.slane %v767, 1
        %v769 = vmax.f32 %v767, %v768
        %v770 = vsel %vm762, %v717, -inf
        %v771 = vrot.slane %v770, 4
        %v772 = vmax.f32 %v770, %v771
        %v773 = vrot.slane %v772, 2
        %v774 = vmax.f32 %v772, %v773
        %v775 = vrot.slane %v774, 1
        %v776 = vmax.f32 %v774, %v775
        %v777 = vsel %vm762, %v718, -inf
        %v778 = vrot.slane %v777, 4
        %v779 = vmax.f32 %v777, %v778
        %v780 = vrot.slane %v779, 2
        %v781 = vmax.f32 %v779, %v780
        %v782 = vrot.slane %v781, 1
        %v783 = vmax.f32 %v781, %v782
        %v784 = vsel %vm762, %v719, -inf
        %v785 = vrot.slane %v784, 4
        %v786 = vmax.f32 %v784, %v785
        %v787 = vrot.slane %v786, 2
        %v788 = vmax.f32 %v786, %v787
        %v789 = vrot.slane %v788, 1
        %v790 = vmax.f32 %v788, %v789
        %v795 = vsel %vm277, %v776, %v769
        %v796 = vsel %vm279, %v783, %v795
        %v797 = vsel %vm281, %v790, %v796
        %vm799 = vcmask 44056
        %v800 = vsel %vm799, %v797, -inf
        %801 = vmax.xlane.f32.xlu0 %v800
        %v802 = vpop.xlane.xlu0 %801
        %v803 = vmax.f32 %v802, 0.0
        %vm804 = vcmask 66608
        %v805 = vsel %vm804, %v716, -inf
        %v806 = vrot.slane %v805, 4
        %v807 = vmax.f32 %v805, %v806
        %v808 = vrot.slane %v807, 2
        %v809 = vmax.f32 %v807, %v808
        %v810 = vrot.slane %v809, 1
        %v811 = vmax.f32 %v809, %v810
        %v812 = vsel %vm804, %v717, -inf
        %v813 = vrot.slane %v812, 4
        %v814 = vmax.f32 %v812, %v813
        %v815 = vrot.slane %v814, 2
        %v816 = vmax.f32 %v814, %v815
        %v817 = vrot.slane %v816, 1
        %v818 = vmax.f32 %v816, %v817
        %v819 = vsel %vm804, %v718, -inf
        %v820 = vrot.slane %v819, 4
        %v821 = vmax.f32 %v819, %v820
        %v822 = vrot.slane %v821, 2
        %v823 = vmax.f32 %v821, %v822
        %v824 = vrot.slane %v823, 1
        %v825 = vmax.f32 %v823, %v824
        %v826 = vsel %vm804, %v719, -inf
        %v827 = vrot.slane %v826, 4
        %v828 = vmax.f32 %v826, %v827
        %v829 = vrot.slane %v828, 2
        %v830 = vmax.f32 %v828, %v829
        %v831 = vrot.slane %v830, 1
        %v832 = vmax.f32 %v830, %v831
        %v837 = vsel %vm277, %v818, %v811
        %v838 = vsel %vm279, %v825, %v837
        %v839 = vsel %vm281, %v832, %v838
        %vm841 = vcmask 68656
        %v842 = vsel %vm841, %v839, -inf
        %843 = vmax.xlane.f32.xlu0 %v842
        %v844 = vpop.xlane.xlu0 %843
        %v845 = vmax.f32 %v844, 0.0
        %v846 = vld [vmem:[%s189 + $0x2] sm:$0x7]
        %v847 = vld [vmem:[%s189 + $0x32] sm:$0x7]
        %v848 = vld [vmem:[%s189 + $0x62] sm:$0x7]
        %v849 = vld [vmem:[%s189 + $0x92] sm:$0x7]
        %v850 = vld [vmem:[%s199 + $0x2] sm:$0x7]
        %v851 = vld [vmem:[%s199 + $0x32] sm:$0x7]
        %v852 = vld [vmem:[%s199 + $0x62] sm:$0x7]
        %v853 = vld [vmem:[%s199 + $0x92] sm:$0x7]
        %v854 = vmax.f32 %v846, %v850
        %v855 = vmax.f32 %v847, %v851
        %v856 = vmax.f32 %v848, %v852
        %v857 = vmax.f32 %v849, %v853
        %vm858 = vcmask 18432
        %v859 = vsel %vm858, %v854, -inf
        %v860 = vrot.slane %v859, 4
        %v861 = vmax.f32 %v859, %v860
        %v862 = vrot.slane %v861, 2
        %v863 = vmax.f32 %v861, %v862
        %v864 = vrot.slane %v863, 1
        %v865 = vmax.f32 %v863, %v864
        %v866 = vsel %vm858, %v855, -inf
        %v867 = vrot.slane %v866, 4
        %v868 = vmax.f32 %v866, %v867
        %v869 = vrot.slane %v868, 2
        %v870 = vmax.f32 %v868, %v869
        %v871 = vrot.slane %v870, 1
        %v872 = vmax.f32 %v870, %v871
        %v873 = vsel %vm858, %v856, -inf
        %v874 = vrot.slane %v873, 4
        %v875 = vmax.f32 %v873, %v874
        %v876 = vrot.slane %v875, 2
        %v877 = vmax.f32 %v875, %v876
        %v878 = vrot.slane %v877, 1
        %v879 = vmax.f32 %v877, %v878
        %v880 = vsel %vm858, %v857, -inf
        %v881 = vrot.slane %v880, 4
        %v882 = vmax.f32 %v880, %v881
        %v883 = vrot.slane %v882, 2
        %v884 = vmax.f32 %v882, %v883
        %v885 = vrot.slane %v884, 1
        %v886 = vmax.f32 %v884, %v885
        %v891 = vsel %vm277, %v872, %v865
        %v892 = vsel %vm279, %v879, %v891
        %v893 = vsel %vm281, %v886, %v892
        %v895 = vsel %vm757, %v893, -inf
        %896 = vmax.xlane.f32.xlu0 %v895
        %v897 = vpop.xlane.xlu0 %896
        %vm898 = vcmask 43032
        %v899 = vsel %vm898, %v854, -inf
        %v900 = vrot.slane %v899, 4
        %v901 = vmax.f32 %v899, %v900
        %v902 = vrot.slane %v901, 2
        %v903 = vmax.f32 %v901, %v902
        %v904 = vrot.slane %v903, 1
        %v905 = vmax.f32 %v903, %v904
        %v906 = vsel %vm898, %v855, -inf
        %v907 = vrot.slane %v906, 4
        %v908 = vmax.f32 %v906, %v907
        %v909 = vrot.slane %v908, 2
        %v910 = vmax.f32 %v908, %v909
        %v911 = vrot.slane %v910, 1
        %v912 = vmax.f32 %v910, %v911
        %v913 = vsel %vm898, %v856, -inf
        %v914 = vrot.slane %v913, 4
        %v915 = vmax.f32 %v913, %v914
        %v916 = vrot.slane %v915, 2
        %v917 = vmax.f32 %v915, %v916
        %v918 = vrot.slane %v917, 1
        %v919 = vmax.f32 %v917, %v918
        %v920 = vsel %vm898, %v857, -inf
        %v921 = vrot.slane %v920, 4
        %v922 = vmax.f32 %v920, %v921
        %v923 = vrot.slane %v922, 2
        %v924 = vmax.f32 %v922, %v923
        %v925 = vrot.slane %v924, 1
        %v926 = vmax.f32 %v924, %v925
        %v931 = vsel %vm277, %v912, %v905
        %v932 = vsel %vm279, %v919, %v931
        %v933 = vsel %vm281, %v926, %v932
        %v935 = vsel %vm799, %v933, -inf
        %936 = vmax.xlane.f32.xlu0 %v935
        %v937 = vpop.xlane.xlu0 %936
        %vm938 = vcmask 67632
        %v939 = vsel %vm938, %v854, -inf
        %v940 = vrot.slane %v939, 4
        %v941 = vmax.f32 %v939, %v940
        %v942 = vrot.slane %v941, 2
        %v943 = vmax.f32 %v941, %v942
        %v944 = vrot.slane %v943, 1
        %v945 = vmax.f32 %v943, %v944
        %v946 = vsel %vm938, %v855, -inf
        %v947 = vrot.slane %v946, 4
        %v948 = vmax.f32 %v946, %v947
        %v949 = vrot.slane %v948, 2
        %v950 = vmax.f32 %v948, %v949
        %v951 = vrot.slane %v950, 1
        %v952 = vmax.f32 %v950, %v951
        %v953 = vsel %vm938, %v856, -inf
        %v954 = vrot.slane %v953, 4
        %v955 = vmax.f32 %v953, %v954
        %v956 = vrot.slane %v955, 2
        %v957 = vmax.f32 %v955, %v956
        %v958 = vrot.slane %v957, 1
        %v959 = vmax.f32 %v957, %v958
        %v960 = vsel %vm938, %v857, -inf
        %v961 = vrot.slane %v960, 4
        %v962 = vmax.f32 %v960, %v961
        %v963 = vrot.slane %v962, 2
        %v964 = vmax.f32 %v962, %v963
        %v965 = vrot.slane %v964, 1
        %v966 = vmax.f32 %v964, %v965
        %v971 = vsel %vm277, %v952, %v945
        %v972 = vsel %vm279, %v959, %v971
        %v973 = vsel %vm281, %v966, %v972
        %v975 = vsel %vm841, %v973, -inf
        %976 = vmax.xlane.f32.xlu0 %v975
        %v977 = vpop.xlane.xlu0 %976
        %v978 = vld [vmem:[%s189 + $0x5] sm:$0x3]
        %v979 = vld [vmem:[%s189 + $0x35] sm:$0x3]
        %v980 = vld [vmem:[%s189 + $0x65] sm:$0x3]
        %v981 = vld [vmem:[%s189 + $0x95] sm:$0x3]
        %v982 = vld [vmem:[%s199 + $0x5] sm:$0x3]
        %v983 = vld [vmem:[%s199 + $0x35] sm:$0x3]
        %v984 = vld [vmem:[%s199 + $0x65] sm:$0x3]
        %v985 = vld [vmem:[%s199 + $0x95] sm:$0x3]
        %v986 = vmax.f32 %v978, %v982
        %v987 = vmax.f32 %v979, %v983
        %v988 = vmax.f32 %v980, %v984
        %v989 = vmax.f32 %v981, %v985
        %v990 = vsel %vm720, %v986, -inf
        %v991 = vrot.slane %v990, 4
        %v992 = vmax.f32 %v990, %v991
        %v993 = vrot.slane %v992, 2
        %v994 = vmax.f32 %v992, %v993
        %v995 = vrot.slane %v994, 1
        %v996 = vmax.f32 %v994, %v995
        %v997 = vsel %vm720, %v987, -inf
        %v998 = vrot.slane %v997, 4
        %v999 = vmax.f32 %v997, %v998
        %v1000 = vrot.slane %v999, 2
        %v1001 = vmax.f32 %v999, %v1000
        %v1002 = vrot.slane %v1001, 1
        %v1003 = vmax.f32 %v1001, %v1002
        %v1004 = vsel %vm720, %v988, -inf
        %v1005 = vrot.slane %v1004, 4
        %v1006 = vmax.f32 %v1004, %v1005
        %v1007 = vrot.slane %v1006, 2
        %v1008 = vmax.f32 %v1006, %v1007
        %v1009 = vrot.slane %v1008, 1
        %v1010 = vmax.f32 %v1008, %v1009
        %v1011 = vsel %vm720, %v989, -inf
        %v1012 = vrot.slane %v1011, 4
        %v1013 = vmax.f32 %v1011, %v1012
        %v1014 = vrot.slane %v1013, 2
        %v1015 = vmax.f32 %v1013, %v1014
        %v1016 = vrot.slane %v1015, 1
        %v1017 = vmax.f32 %v1015, %v1016
        %v1022 = vsel %vm277, %v1003, %v996
        %v1023 = vsel %vm279, %v1010, %v1022
        %v1024 = vsel %vm281, %v1017, %v1023
        %v1026 = vsel %vm757, %v1024, -inf
        %1027 = vmax.xlane.f32.xlu0 %v1026
        %v1028 = vpop.xlane.xlu0 %1027
        %v1029 = vmax.f32 %v1028, 0.0
        %v1030 = vsel %vm762, %v986, -inf
        %v1031 = vrot.slane %v1030, 4
        %v1032 = vmax.f32 %v1030, %v1031
        %v1033 = vrot.slane %v1032, 2
        %v1034 = vmax.f32 %v1032, %v1033
        %v1035 = vrot.slane %v1034, 1
        %v1036 = vmax.f32 %v1034, %v1035
        %v1037 = vsel %vm762, %v987, -inf
        %v1038 = vrot.slane %v1037, 4
        %v1039 = vmax.f32 %v1037, %v1038
        %v1040 = vrot.slane %v1039, 2
        %v1041 = vmax.f32 %v1039, %v1040
        %v1042 = vrot.slane %v1041, 1
        %v1043 = vmax.f32 %v1041, %v1042
        %v1044 = vsel %vm762, %v988, -inf
        %v1045 = vrot.slane %v1044, 4
        %v1046 = vmax.f32 %v1044, %v1045
        %v1047 = vrot.slane %v1046, 2
        %v1048 = vmax.f32 %v1046, %v1047
        %v1049 = vrot.slane %v1048, 1
        %v1050 = vmax.f32 %v1048, %v1049
        %v1051 = vsel %vm762, %v989, -inf
        %v1052 = vrot.slane %v1051, 4
        %v1053 = vmax.f32 %v1051, %v1052
        %v1054 = vrot.slane %v1053, 2
        %v1055 = vmax.f32 %v1053, %v1054
        %v1056 = vrot.slane %v1055, 1
        %v1057 = vmax.f32 %v1055, %v1056
        %v1062 = vsel %vm277, %v1043, %v1036
        %v1063 = vsel %vm279, %v1050, %v1062
        %v1064 = vsel %vm281, %v1057, %v1063
        %v1066 = vsel %vm799, %v1064, -inf
        %1067 = vmax.xlane.f32.xlu0 %v1066
        %v1068 = vpop.xlane.xlu0 %1067
        %v1069 = vmax.f32 %v1068, 0.0
        %v1070 = vsel %vm804, %v986, -inf
        %v1071 = vrot.slane %v1070, 4
        %v1072 = vmax.f32 %v1070, %v1071
        %v1073 = vrot.slane %v1072, 2
        %v1074 = vmax.f32 %v1072, %v1073
        %v1075 = vrot.slane %v1074, 1
        %v1076 = vmax.f32 %v1074, %v1075
        %v1077 = vsel %vm804, %v987, -inf
        %v1078 = vrot.slane %v1077, 4
        %v1079 = vmax.f32 %v1077, %v1078
        %v1080 = vrot.slane %v1079, 2
        %v1081 = vmax.f32 %v1079, %v1080
        %v1082 = vrot.slane %v1081, 1
        %v1083 = vmax.f32 %v1081, %v1082
        %v1084 = vsel %vm804, %v988, -inf
        %v1085 = vrot.slane %v1084, 4
        %v1086 = vmax.f32 %v1084, %v1085
        %v1087 = vrot.slane %v1086, 2
        %v1088 = vmax.f32 %v1086, %v1087
        %v1089 = vrot.slane %v1088, 1
        %v1090 = vmax.f32 %v1088, %v1089
        %v1091 = vsel %vm804, %v989, -inf
        %v1092 = vrot.slane %v1091, 4
        %v1093 = vmax.f32 %v1091, %v1092
        %v1094 = vrot.slane %v1093, 2
        %v1095 = vmax.f32 %v1093, %v1094
        %v1096 = vrot.slane %v1095, 1
        %v1097 = vmax.f32 %v1095, %v1096
        %v1102 = vsel %vm277, %v1083, %v1076
        %v1103 = vsel %vm279, %v1090, %v1102
        %v1104 = vsel %vm281, %v1097, %v1103
        %v1106 = vsel %vm841, %v1104, -inf
        %1107 = vmax.xlane.f32.xlu0 %v1106
        %v1108 = vpop.xlane.xlu0 %1107
        %v1109 = vmax.f32 %v1108, 0.0
        %v1110 = vld [vmem:[%s208] sm:$0x3]
        %v1111 = vld [vmem:[%s208 + $0x30] sm:$0x3]
        %v1112 = vld [vmem:[%s208 + $0x60] sm:$0x3]
        %v1113 = vld [vmem:[%s208 + $0x90] sm:$0x3]
        %v1114 = vld [vmem:[%s217] sm:$0x3]
        %v1115 = vld [vmem:[%s217 + $0x30] sm:$0x3]
        %v1116 = vld [vmem:[%s217 + $0x60] sm:$0x3]
        %v1117 = vld [vmem:[%s217 + $0x90] sm:$0x3]
        %v1118 = vmax.f32 %v1110, %v1114
        %v1119 = vmax.f32 %v1111, %v1115
        %v1120 = vmax.f32 %v1112, %v1116
        %v1121 = vmax.f32 %v1113, %v1117
        %v1122 = vsel %vm720, %v1118, -inf
        %v1123 = vrot.slane %v1122, 4
        %v1124 = vmax.f32 %v1122, %v1123
        %v1125 = vrot.slane %v1124, 2
        %v1126 = vmax.f32 %v1124, %v1125
        %v1127 = vrot.slane %v1126, 1
        %v1128 = vmax.f32 %v1126, %v1127
        %v1129 = vsel %vm720, %v1119, -inf
        %v1130 = vrot.slane %v1129, 4
        %v1131 = vmax.f32 %v1129, %v1130
        %v1132 = vrot.slane %v1131, 2
        %v1133 = vmax.f32 %v1131, %v1132
        %v1134 = vrot.slane %v1133, 1
        %v1135 = vmax.f32 %v1133, %v1134
        %v1136 = vsel %vm720, %v1120, -inf
        %v1137 = vrot.slane %v1136, 4
        %v1138 = vmax.f32 %v1136, %v1137
        %v1139 = vrot.slane %v1138, 2
        %v1140 = vmax.f32 %v1138, %v1139
        %v1141 = vrot.slane %v1140, 1
        %v1142 = vmax.f32 %v1140, %v1141
        %v1143 = vsel %vm720, %v1121, -inf
        %v1144 = vrot.slane %v1143, 4
        %v1145 = vmax.f32 %v1143, %v1144
        %v1146 = vrot.slane %v1145, 2
        %v1147 = vmax.f32 %v1145, %v1146
        %v1148 = vrot.slane %v1147, 1
        %v1149 = vmax.f32 %v1147, %v1148
        %v1154 = vsel %vm277, %v1135, %v1128
        %v1155 = vsel %vm279, %v1142, %v1154
        %v1156 = vsel %vm281, %v1149, %v1155
        %v1158 = vsel %vm757, %v1156, -inf
        %1159 = vmax.xlane.f32.xlu0 %v1158
        %v1160 = vpop.xlane.xlu0 %1159
        %v1161 = vmax.f32 %v1160, 0.0
        %v1162 = vsel %vm762, %v1118, -inf
        %v1163 = vrot.slane %v1162, 4
        %v1164 = vmax.f32 %v1162, %v1163
        %v1165 = vrot.slane %v1164, 2
        %v1166 = vmax.f32 %v1164, %v1165
        %v1167 = vrot.slane %v1166, 1
        %v1168 = vmax.f32 %v1166, %v1167
        %v1169 = vsel %vm762, %v1119, -inf
        %v1170 = vrot.slane %v1169, 4
        %v1171 = vmax.f32 %v1169, %v1170
        %v1172 = vrot.slane %v1171, 2
        %v1173 = vmax.f32 %v1171, %v1172
        %v1174 = vrot.slane %v1173, 1
        %v1175 = vmax.f32 %v1173, %v1174
        %v1176 = vsel %vm762, %v1120, -inf
        %v1177 = vrot.slane %v1176, 4
        %v1178 = vmax.f32 %v1176, %v1177
        %v1179 = vrot.slane %v1178, 2
        %v1180 = vmax.f32 %v1178, %v1179
        %v1181 = vrot.slane %v1180, 1
        %v1182 = vmax.f32 %v1180, %v1181
        %v1183 = vsel %vm762, %v1121, -inf
        %v1184 = vrot.slane %v1183, 4
        %v1185 = vmax.f32 %v1183, %v1184
        %v1186 = vrot.slane %v1185, 2
        %v1187 = vmax.f32 %v1185, %v1186
        %v1188 = vrot.slane %v1187, 1
        %v1189 = vmax.f32 %v1187, %v1188
        %v1194 = vsel %vm277, %v1175, %v1168
        %v1195 = vsel %vm279, %v1182, %v1194
        %v1196 = vsel %vm281, %v1189, %v1195
        %v1198 = vsel %vm799, %v1196, -inf
        %1199 = vmax.xlane.f32.xlu0 %v1198
        %v1200 = vpop.xlane.xlu0 %1199
        %v1201 = vmax.f32 %v1200, 0.0
        %v1202 = vsel %vm804, %v1118, -inf
        %v1203 = vrot.slane %v1202, 4
        %v1204 = vmax.f32 %v1202, %v1203
        %v1205 = vrot.slane %v1204, 2
        %v1206 = vmax.f32 %v1204, %v1205
        %v1207 = vrot.slane %v1206, 1
        %v1208 = vmax.f32 %v1206, %v1207
        %v1209 = vsel %vm804, %v1119, -inf
        %v1210 = vrot.slane %v1209, 4
        %v1211 = vmax.f32 %v1209, %v1210
        %v1212 = vrot.slane %v1211, 2
        %v1213 = vmax.f32 %v1211, %v1212
        %v1214 = vrot.slane %v1213, 1
        %v1215 = vmax.f32 %v1213, %v1214
        %v1216 = vsel %vm804, %v1120, -inf
        %v1217 = vrot.slane %v1216, 4
        %v1218 = vmax.f32 %v1216, %v1217
        %v1219 = vrot.slane %v1218, 2
        %v1220 = vmax.f32 %v1218, %v1219
        %v1221 = vrot.slane %v1220, 1
        %v1222 = vmax.f32 %v1220, %v1221
        %v1223 = vsel %vm804, %v1121, -inf
        %v1224 = vrot.slane %v1223, 4
        %v1225 = vmax.f32 %v1223, %v1224
        %v1226 = vrot.slane %v1225, 2
        %v1227 = vmax.f32 %v1225, %v1226
        %v1228 = vrot.slane %v1227, 1
        %v1229 = vmax.f32 %v1227, %v1228
        %v1234 = vsel %vm277, %v1215, %v1208
        %v1235 = vsel %vm279, %v1222, %v1234
        %v1236 = vsel %vm281, %v1229, %v1235
        %v1238 = vsel %vm841, %v1236, -inf
        %1239 = vmax.xlane.f32.xlu0 %v1238
        %v1240 = vpop.xlane.xlu0 %1239
        %v1241 = vmax.f32 %v1240, 0.0
        %v1242 = vld [vmem:[%s208 + $0x2] sm:$0x7]
        %v1243 = vld [vmem:[%s208 + $0x32] sm:$0x7]
        %v1244 = vld [vmem:[%s208 + $0x62] sm:$0x7]
        %v1245 = vld [vmem:[%s208 + $0x92] sm:$0x7]
        %v1246 = vld [vmem:[%s217 + $0x2] sm:$0x7]
        %v1247 = vld [vmem:[%s217 + $0x32] sm:$0x7]
        %v1248 = vld [vmem:[%s217 + $0x62] sm:$0x7]
        %v1249 = vld [vmem:[%s217 + $0x92] sm:$0x7]
        %v1250 = vmax.f32 %v1242, %v1246
        %v1251 = vmax.f32 %v1243, %v1247
        %v1252 = vmax.f32 %v1244, %v1248
        %v1253 = vmax.f32 %v1245, %v1249
        %v1254 = vsel %vm858, %v1250, -inf
        %v1255 = vrot.slane %v1254, 4
        %v1256 = vmax.f32 %v1254, %v1255
        %v1257 = vrot.slane %v1256, 2
        %v1258 = vmax.f32 %v1256, %v1257
        %v1259 = vrot.slane %v1258, 1
        %v1260 = vmax.f32 %v1258, %v1259
        %v1261 = vsel %vm858, %v1251, -inf
        %v1262 = vrot.slane %v1261, 4
        %v1263 = vmax.f32 %v1261, %v1262
        %v1264 = vrot.slane %v1263, 2
        %v1265 = vmax.f32 %v1263, %v1264
        %v1266 = vrot.slane %v1265, 1
        %v1267 = vmax.f32 %v1265, %v1266
        %v1268 = vsel %vm858, %v1252, -inf
        %v1269 = vrot.slane %v1268, 4
        %v1270 = vmax.f32 %v1268, %v1269
        %v1271 = vrot.slane %v1270, 2
        %v1272 = vmax.f32 %v1270, %v1271
        %v1273 = vrot.slane %v1272, 1
        %v1274 = vmax.f32 %v1272, %v1273
        %v1275 = vsel %vm858, %v1253, -inf
        %v1276 = vrot.slane %v1275, 4
        %v1277 = vmax.f32 %v1275, %v1276
        %v1278 = vrot.slane %v1277, 2
        %v1279 = vmax.f32 %v1277, %v1278
        %v1280 = vrot.slane %v1279, 1
        %v1281 = vmax.f32 %v1279, %v1280
        %v1286 = vsel %vm277, %v1267, %v1260
        %v1287 = vsel %vm279, %v1274, %v1286
        %v1288 = vsel %vm281, %v1281, %v1287
        %v1290 = vsel %vm757, %v1288, -inf
        %1291 = vmax.xlane.f32.xlu0 %v1290
        %v1292 = vpop.xlane.xlu0 %1291
        %v1293 = vsel %vm898, %v1250, -inf
        %v1294 = vrot.slane %v1293, 4
        %v1295 = vmax.f32 %v1293, %v1294
        %v1296 = vrot.slane %v1295, 2
        %v1297 = vmax.f32 %v1295, %v1296
        %v1298 = vrot.slane %v1297, 1
        %v1299 = vmax.f32 %v1297, %v1298
        %v1300 = vsel %vm898, %v1251, -inf
        %v1301 = vrot.slane %v1300, 4
        %v1302 = vmax.f32 %v1300, %v1301
        %v1303 = vrot.slane %v1302, 2
        %v1304 = vmax.f32 %v1302, %v1303
        %v1305 = vrot.slane %v1304, 1
        %v1306 = vmax.f32 %v1304, %v1305
        %v1307 = vsel %vm898, %v1252, -inf
        %v1308 = vrot.slane %v1307, 4
        %v1309 = vmax.f32 %v1307, %v1308
        %v1310 = vrot.slane %v1309, 2
        %v1311 = vmax.f32 %v1309, %v1310
        %v1312 = vrot.slane %v1311, 1
        %v1313 = vmax.f32 %v1311, %v1312
        %v1314 = vsel %vm898, %v1253, -inf
        %v1315 = vrot.slane %v1314, 4
        %v1316 = vmax.f32 %v1314, %v1315
        %v1317 = vrot.slane %v1316, 2
        %v1318 = vmax.f32 %v1316, %v1317
        %v1319 = vrot.slane %v1318, 1
        %v1320 = vmax.f32 %v1318, %v1319
        %v1325 = vsel %vm277, %v1306, %v1299
        %v1326 = vsel %vm279, %v1313, %v1325
        %v1327 = vsel %vm281, %v1320, %v1326
        %v1329 = vsel %vm799, %v1327, -inf
        %1330 = vmax.xlane.f32.xlu0 %v1329
        %v1331 = vpop.xlane.xlu0 %1330
        %v1332 = vsel %vm938, %v1250, -inf
        %v1333 = vrot.slane %v1332, 4
        %v1334 = vmax.f32 %v1332, %v1333
        %v1335 = vrot.slane %v1334, 2
        %v1336 = vmax.f32 %v1334, %v1335
        %v1337 = vrot.slane %v1336, 1
        %v1338 = vmax.f32 %v1336, %v1337
        %v1339 = vsel %vm938, %v1251, -inf
        %v1340 = vrot.slane %v1339, 4
        %v1341 = vmax.f32 %v1339, %v1340
        %v1342 = vrot.slane %v1341, 2
        %v1343 = vmax.f32 %v1341, %v1342
        %v1344 = vrot.slane %v1343, 1
        %v1345 = vmax.f32 %v1343, %v1344
        %v1346 = vsel %vm938, %v1252, -inf
        %v1347 = vrot.slane %v1346, 4
        %v1348 = vmax.f32 %v1346, %v1347
        %v1349 = vrot.slane %v1348, 2
        %v1350 = vmax.f32 %v1348, %v1349
        %v1351 = vrot.slane %v1350, 1
        %v1352 = vmax.f32 %v1350, %v1351
        %v1353 = vsel %vm938, %v1253, -inf
        %v1354 = vrot.slane %v1353, 4
        %v1355 = vmax.f32 %v1353, %v1354
        %v1356 = vrot.slane %v1355, 2
        %v1357 = vmax.f32 %v1355, %v1356
        %v1358 = vrot.slane %v1357, 1
        %v1359 = vmax.f32 %v1357, %v1358
        %v1364 = vsel %vm277, %v1345, %v1338
        %v1365 = vsel %vm279, %v1352, %v1364
        %v1366 = vsel %vm281, %v1359, %v1365
        %v1368 = vsel %vm841, %v1366, -inf
        %1369 = vmax.xlane.f32.xlu0 %v1368
        %v1370 = vpop.xlane.xlu0 %1369
        %v1371 = vld [vmem:[%s208 + $0x5] sm:$0x3]
        %v1372 = vld [vmem:[%s208 + $0x35] sm:$0x3]
        %v1373 = vld [vmem:[%s208 + $0x65] sm:$0x3]
        %v1374 = vld [vmem:[%s208 + $0x95] sm:$0x3]
        %v1375 = vld [vmem:[%s217 + $0x5] sm:$0x3]
        %v1376 = vld [vmem:[%s217 + $0x35] sm:$0x3]
        %v1377 = vld [vmem:[%s217 + $0x65] sm:$0x3]
        %v1378 = vld [vmem:[%s217 + $0x95] sm:$0x3]
        %v1379 = vmax.f32 %v1371, %v1375
        %v1380 = vmax.f32 %v1372, %v1376
        %v1381 = vmax.f32 %v1373, %v1377
        %v1382 = vmax.f32 %v1374, %v1378
        %v1383 = vsel %vm720, %v1379, -inf
        %v1384 = vrot.slane %v1383, 4
        %v1385 = vmax.f32 %v1383, %v1384
        %v1386 = vrot.slane %v1385, 2
        %v1387 = vmax.f32 %v1385, %v1386
        %v1388 = vrot.slane %v1387, 1
        %v1389 = vmax.f32 %v1387, %v1388
        %v1390 = vsel %vm720, %v1380, -inf
        %v1391 = vrot.slane %v1390, 4
        %v1392 = vmax.f32 %v1390, %v1391
        %v1393 = vrot.slane %v1392, 2
        %v1394 = vmax.f32 %v1392, %v1393
        %v1395 = vrot.slane %v1394, 1
        %v1396 = vmax.f32 %v1394, %v1395
        %v1397 = vsel %vm720, %v1381, -inf
        %v1398 = vrot.slane %v1397, 4
        %v1399 = vmax.f32 %v1397, %v1398
        %v1400 = vrot.slane %v1399, 2
        %v1401 = vmax.f32 %v1399, %v1400
        %v1402 = vrot.slane %v1401, 1
        %v1403 = vmax.f32 %v1401, %v1402
        %v1404 = vsel %vm720, %v1382, -inf
        %v1405 = vrot.slane %v1404, 4
        %v1406 = vmax.f32 %v1404, %v1405
        %v1407 = vrot.slane %v1406, 2
        %v1408 = vmax.f32 %v1406, %v1407
        %v1409 = vrot.slane %v1408, 1
        %v1410 = vmax.f32 %v1408, %v1409
        %v1415 = vsel %vm277, %v1396, %v1389
        %v1416 = vsel %vm279, %v1403, %v1415
        %v1417 = vsel %vm281, %v1410, %v1416
        %v1419 = vsel %vm757, %v1417, -inf
        %1420 = vmax.xlane.f32.xlu0 %v1419
        %v1421 = vpop.xlane.xlu0 %1420
        %v1422 = vmax.f32 %v1421, 0.0
        %v1423 = vsel %vm762, %v1379, -inf
        %v1424 = vrot.slane %v1423, 4
        %v1425 = vmax.f32 %v1423, %v1424
        %v1426 = vrot.slane %v1425, 2
        %v1427 = vmax.f32 %v1425, %v1426
        %v1428 = vrot.slane %v1427, 1
        %v1429 = vmax.f32 %v1427, %v1428
        %v1430 = vsel %vm762, %v1380, -inf
        %v1431 = vrot.slane %v1430, 4
        %v1432 = vmax.f32 %v1430, %v1431
        %v1433 = vrot.slane %v1432, 2
        %v1434 = vmax.f32 %v1432, %v1433
        %v1435 = vrot.slane %v1434, 1
        %v1436 = vmax.f32 %v1434, %v1435
        %v1437 = vsel %vm762, %v1381, -inf
        %v1438 = vrot.slane %v1437, 4
        %v1439 = vmax.f32 %v1437, %v1438
        %v1440 = vrot.slane %v1439, 2
        %v1441 = vmax.f32 %v1439, %v1440
        %v1442 = vrot.slane %v1441, 1
        %v1443 = vmax.f32 %v1441, %v1442
        %v1444 = vsel %vm762, %v1382, -inf
        %v1445 = vrot.slane %v1444, 4
        %v1446 = vmax.f32 %v1444, %v1445
        %v1447 = vrot.slane %v1446, 2
        %v1448 = vmax.f32 %v1446, %v1447
        %v1449 = vrot.slane %v1448, 1
        %v1450 = vmax.f32 %v1448, %v1449
        %v1455 = vsel %vm277, %v1436, %v1429
        %v1456 = vsel %vm279, %v1443, %v1455
        %v1457 = vsel %vm281, %v1450, %v1456
        %v1459 = vsel %vm799, %v1457, -inf
        %1460 = vmax.xlane.f32.xlu0 %v1459
        %v1461 = vpop.xlane.xlu0 %1460
        %v1462 = vmax.f32 %v1461, 0.0
        %v1463 = vsel %vm804, %v1379, -inf
        %v1464 = vrot.slane %v1463, 4
        %v1465 = vmax.f32 %v1463, %v1464
        %v1466 = vrot.slane %v1465, 2
        %v1467 = vmax.f32 %v1465, %v1466
        %v1468 = vrot.slane %v1467, 1
        %v1469 = vmax.f32 %v1467, %v1468
        %v1470 = vsel %vm804, %v1380, -inf
        %v1471 = vrot.slane %v1470, 4
        %v1472 = vmax.f32 %v1470, %v1471
        %v1473 = vrot.slane %v1472, 2
        %v1474 = vmax.f32 %v1472, %v1473
        %v1475 = vrot.slane %v1474, 1
        %v1476 = vmax.f32 %v1474, %v1475
        %v1477 = vsel %vm804, %v1381, -inf
        %v1478 = vrot.slane %v1477, 4
        %v1479 = vmax.f32 %v1477, %v1478
        %v1480 = vrot.slane %v1479, 2
        %v1481 = vmax.f32 %v1479, %v1480
        %v1482 = vrot.slane %v1481, 1
        %v1483 = vmax.f32 %v1481, %v1482
        %v1484 = vsel %vm804, %v1382, -inf
        %v1485 = vrot.slane %v1484, 4
        %v1486 = vmax.f32 %v1484, %v1485
        %v1487 = vrot.slane %v1486, 2
        %v1488 = vmax.f32 %v1486, %v1487
        %v1489 = vrot.slane %v1488, 1
        %v1490 = vmax.f32 %v1488, %v1489
        %v1495 = vsel %vm277, %v1476, %v1469
        %v1496 = vsel %vm279, %v1483, %v1495
        %v1497 = vsel %vm281, %v1490, %v1496
        %v1499 = vsel %vm841, %v1497, -inf
        %1500 = vmax.xlane.f32.xlu0 %v1499
        %v1501 = vpop.xlane.xlu0 %1500
        %v1502 = vmax.f32 %v1501, 0.0
        %v1503 = vld [vmem:[%s226] sm:$0x3]
        %v1504 = vld [vmem:[%s226 + $0x30] sm:$0x3]
        %v1505 = vld [vmem:[%s226 + $0x60] sm:$0x3]
        %v1506 = vld [vmem:[%s226 + $0x90] sm:$0x3]
        %v1507 = vld [vmem:[%s235] sm:$0x3]
        %v1508 = vld [vmem:[%s235 + $0x30] sm:$0x3]
        %v1509 = vld [vmem:[%s235 + $0x60] sm:$0x3]
        %v1510 = vld [vmem:[%s235 + $0x90] sm:$0x3]
        %v1511 = vmax.f32 %v1503, %v1507
        %v1512 = vmax.f32 %v1504, %v1508
        %v1513 = vmax.f32 %v1505, %v1509
        %v1514 = vmax.f32 %v1506, %v1510
        %v1515 = vsel %vm720, %v1511, -inf
        %v1516 = vrot.slane %v1515, 4
        %v1517 = vmax.f32 %v1515, %v1516
        %v1518 = vrot.slane %v1517, 2
        %v1519 = vmax.f32 %v1517, %v1518
        %v1520 = vrot.slane %v1519, 1
        %v1521 = vmax.f32 %v1519, %v1520
        %v1522 = vsel %vm720, %v1512, -inf
        %v1523 = vrot.slane %v1522, 4
        %v1524 = vmax.f32 %v1522, %v1523
        %v1525 = vrot.slane %v1524, 2
        %v1526 = vmax.f32 %v1524, %v1525
        %v1527 = vrot.slane %v1526, 1
        %v1528 = vmax.f32 %v1526, %v1527
        %v1529 = vsel %vm720, %v1513, -inf
        %v1530 = vrot.slane %v1529, 4
        %v1531 = vmax.f32 %v1529, %v1530
        %v1532 = vrot.slane %v1531, 2
        %v1533 = vmax.f32 %v1531, %v1532
        %v1534 = vrot.slane %v1533, 1
        %v1535 = vmax.f32 %v1533, %v1534
        %v1536 = vsel %vm720, %v1514, -inf
        %v1537 = vrot.slane %v1536, 4
        %v1538 = vmax.f32 %v1536, %v1537
        %v1539 = vrot.slane %v1538, 2
        %v1540 = vmax.f32 %v1538, %v1539
        %v1541 = vrot.slane %v1540, 1
        %v1542 = vmax.f32 %v1540, %v1541
        %v1547 = vsel %vm277, %v1528, %v1521
        %v1548 = vsel %vm279, %v1535, %v1547
        %v1549 = vsel %vm281, %v1542, %v1548
        %v1551 = vsel %vm757, %v1549, -inf
        %1552 = vmax.xlane.f32.xlu0 %v1551
        %v1553 = vpop.xlane.xlu0 %1552
        %v1554 = vmax.f32 %v1553, 0.0
        %v1555 = vsel %vm762, %v1511, -inf
        %v1556 = vrot.slane %v1555, 4
        %v1557 = vmax.f32 %v1555, %v1556
        %v1558 = vrot.slane %v1557, 2
        %v1559 = vmax.f32 %v1557, %v1558
        %v1560 = vrot.slane %v1559, 1
        %v1561 = vmax.f32 %v1559, %v1560
        %v1562 = vsel %vm762, %v1512, -inf
        %v1563 = vrot.slane %v1562, 4
        %v1564 = vmax.f32 %v1562, %v1563
        %v1565 = vrot.slane %v1564, 2
        %v1566 = vmax.f32 %v1564, %v1565
        %v1567 = vrot.slane %v1566, 1
        %v1568 = vmax.f32 %v1566, %v1567
        %v1569 = vsel %vm762, %v1513, -inf
        %v1570 = vrot.slane %v1569, 4
        %v1571 = vmax.f32 %v1569, %v1570
        %v1572 = vrot.slane %v1571, 2
        %v1573 = vmax.f32 %v1571, %v1572
        %v1574 = vrot.slane %v1573, 1
        %v1575 = vmax.f32 %v1573, %v1574
        %v1576 = vsel %vm762, %v1514, -inf
        %v1577 = vrot.slane %v1576, 4
        %v1578 = vmax.f32 %v1576, %v1577
        %v1579 = vrot.slane %v1578, 2
        %v1580 = vmax.f32 %v1578, %v1579
        %v1581 = vrot.slane %v1580, 1
        %v1582 = vmax.f32 %v1580, %v1581
        %v1587 = vsel %vm277, %v1568, %v1561
        %v1588 = vsel %vm279, %v1575, %v1587
        %v1589 = vsel %vm281, %v1582, %v1588
        %v1591 = vsel %vm799, %v1589, -inf
        %1592 = vmax.xlane.f32.xlu0 %v1591
        %v1593 = vpop.xlane.xlu0 %1592
        %v1594 = vmax.f32 %v1593, 0.0
        %v1595 = vsel %vm804, %v1511, -inf
        %v1596 = vrot.slane %v1595, 4
        %v1597 = vmax.f32 %v1595, %v1596
        %v1598 = vrot.slane %v1597, 2
        %v1599 = vmax.f32 %v1597, %v1598
        %v1600 = vrot.slane %v1599, 1
        %v1601 = vmax.f32 %v1599, %v1600
        %v1602 = vsel %vm804, %v1512, -inf
        %v1603 = vrot.slane %v1602, 4
        %v1604 = vmax.f32 %v1602, %v1603
        %v1605 = vrot.slane %v1604, 2
        %v1606 = vmax.f32 %v1604, %v1605
        %v1607 = vrot.slane %v1606, 1
        %v1608 = vmax.f32 %v1606, %v1607
        %v1609 = vsel %vm804, %v1513, -inf
        %v1610 = vrot.slane %v1609, 4
        %v1611 = vmax.f32 %v1609, %v1610
        %v1612 = vrot.slane %v1611, 2
        %v1613 = vmax.f32 %v1611, %v1612
        %v1614 = vrot.slane %v1613, 1
        %v1615 = vmax.f32 %v1613, %v1614
        %v1616 = vsel %vm804, %v1514, -inf
        %v1617 = vrot.slane %v1616, 4
        %v1618 = vmax.f32 %v1616, %v1617
        %v1619 = vrot.slane %v1618, 2
        %v1620 = vmax.f32 %v1618, %v1619
        %v1621 = vrot.slane %v1620, 1
        %v1622 = vmax.f32 %v1620, %v1621
        %v1627 = vsel %vm277, %v1608, %v1601
        %v1628 = vsel %vm279, %v1615, %v1627
        %v1629 = vsel %vm281, %v1622, %v1628
        %v1631 = vsel %vm841, %v1629, -inf
        %1632 = vmax.xlane.f32.xlu0 %v1631
        %v1633 = vpop.xlane.xlu0 %1632
        %v1634 = vmax.f32 %v1633, 0.0
        %v1635 = vld [vmem:[%s226 + $0x2] sm:$0x7]
        %v1636 = vld [vmem:[%s226 + $0x32] sm:$0x7]
        %v1637 = vld [vmem:[%s226 + $0x62] sm:$0x7]
        %v1638 = vld [vmem:[%s226 + $0x92] sm:$0x7]
        %v1639 = vld [vmem:[%s235 + $0x2] sm:$0x7]
        %v1640 = vld [vmem:[%s235 + $0x32] sm:$0x7]
        %v1641 = vld [vmem:[%s235 + $0x62] sm:$0x7]
        %v1642 = vld [vmem:[%s235 + $0x92] sm:$0x7]
        %v1643 = vmax.f32 %v1635, %v1639
        %v1644 = vmax.f32 %v1636, %v1640
        %v1645 = vmax.f32 %v1637, %v1641
        %v1646 = vmax.f32 %v1638, %v1642
        %v1647 = vsel %vm858, %v1643, -inf
        %v1648 = vrot.slane %v1647, 4
        %v1649 = vmax.f32 %v1647, %v1648
        %v1650 = vrot.slane %v1649, 2
        %v1651 = vmax.f32 %v1649, %v1650
        %v1652 = vrot.slane %v1651, 1
        %v1653 = vmax.f32 %v1651, %v1652
        %v1654 = vsel %vm858, %v1644, -inf
        %v1655 = vrot.slane %v1654, 4
        %v1656 = vmax.f32 %v1654, %v1655
        %v1657 = vrot.slane %v1656, 2
        %v1658 = vmax.f32 %v1656, %v1657
        %v1659 = vrot.slane %v1658, 1
        %v1660 = vmax.f32 %v1658, %v1659
        %v1661 = vsel %vm858, %v1645, -inf
        %v1662 = vrot.slane %v1661, 4
        %v1663 = vmax.f32 %v1661, %v1662
        %v1664 = vrot.slane %v1663, 2
        %v1665 = vmax.f32 %v1663, %v1664
        %v1666 = vrot.slane %v1665, 1
        %v1667 = vmax.f32 %v1665, %v1666
        %v1668 = vsel %vm858, %v1646, -inf
        %v1669 = vrot.slane %v1668, 4
        %v1670 = vmax.f32 %v1668, %v1669
        %v1671 = vrot.slane %v1670, 2
        %v1672 = vmax.f32 %v1670, %v1671
        %v1673 = vrot.slane %v1672, 1
        %v1674 = vmax.f32 %v1672, %v1673
        %v1679 = vsel %vm277, %v1660, %v1653
        %v1680 = vsel %vm279, %v1667, %v1679
        %v1681 = vsel %vm281, %v1674, %v1680
        %v1683 = vsel %vm757, %v1681, -inf
        %1684 = vmax.xlane.f32.xlu0 %v1683
        %v1685 = vpop.xlane.xlu0 %1684
        %v1686 = vsel %vm898, %v1643, -inf
        %v1687 = vrot.slane %v1686, 4
        %v1688 = vmax.f32 %v1686, %v1687
        %v1689 = vrot.slane %v1688, 2
        %v1690 = vmax.f32 %v1688, %v1689
        %v1691 = vrot.slane %v1690, 1
        %v1692 = vmax.f32 %v1690, %v1691
        %v1693 = vsel %vm898, %v1644, -inf
        %v1694 = vrot.slane %v1693, 4
        %v1695 = vmax.f32 %v1693, %v1694
        %v1696 = vrot.slane %v1695, 2
        %v1697 = vmax.f32 %v1695, %v1696
        %v1698 = vrot.slane %v1697, 1
        %v1699 = vmax.f32 %v1697, %v1698
        %v1700 = vsel %vm898, %v1645, -inf
        %v1701 = vrot.slane %v1700, 4
        %v1702 = vmax.f32 %v1700, %v1701
        %v1703 = vrot.slane %v1702, 2
        %v1704 = vmax.f32 %v1702, %v1703
        %v1705 = vrot.slane %v1704, 1
        %v1706 = vmax.f32 %v1704, %v1705
        %v1707 = vsel %vm898, %v1646, -inf
        %v1708 = vrot.slane %v1707, 4
        %v1709 = vmax.f32 %v1707, %v1708
        %v1710 = vrot.slane %v1709, 2
        %v1711 = vmax.f32 %v1709, %v1710
        %v1712 = vrot.slane %v1711, 1
        %v1713 = vmax.f32 %v1711, %v1712
        %v1718 = vsel %vm277, %v1699, %v1692
        %v1719 = vsel %vm279, %v1706, %v1718
        %v1720 = vsel %vm281, %v1713, %v1719
        %v1722 = vsel %vm799, %v1720, -inf
        %1723 = vmax.xlane.f32.xlu0 %v1722
        %v1724 = vpop.xlane.xlu0 %1723
        %v1725 = vsel %vm938, %v1643, -inf
        %v1726 = vrot.slane %v1725, 4
        %v1727 = vmax.f32 %v1725, %v1726
        %v1728 = vrot.slane %v1727, 2
        %v1729 = vmax.f32 %v1727, %v1728
        %v1730 = vrot.slane %v1729, 1
        %v1731 = vmax.f32 %v1729, %v1730
        %v1732 = vsel %vm938, %v1644, -inf
        %v1733 = vrot.slane %v1732, 4
        %v1734 = vmax.f32 %v1732, %v1733
        %v1735 = vrot.slane %v1734, 2
        %v1736 = vmax.f32 %v1734, %v1735
        %v1737 = vrot.slane %v1736, 1
        %v1738 = vmax.f32 %v1736, %v1737
        %v1739 = vsel %vm938, %v1645, -inf
        %v1740 = vrot.slane %v1739, 4
        %v1741 = vmax.f32 %v1739, %v1740
        %v1742 = vrot.slane %v1741, 2
        %v1743 = vmax.f32 %v1741, %v1742
        %v1744 = vrot.slane %v1743, 1
        %v1745 = vmax.f32 %v1743, %v1744
        %v1746 = vsel %vm938, %v1646, -inf
        %v1747 = vrot.slane %v1746, 4
        %v1748 = vmax.f32 %v1746, %v1747
        %v1749 = vrot.slane %v1748, 2
        %v1750 = vmax.f32 %v1748, %v1749
        %v1751 = vrot.slane %v1750, 1
        %v1752 = vmax.f32 %v1750, %v1751
        %v1757 = vsel %vm277, %v1738, %v1731
        %v1758 = vsel %vm279, %v1745, %v1757
        %v1759 = vsel %vm281, %v1752, %v1758
        %v1761 = vsel %vm841, %v1759, -inf
        %1762 = vmax.xlane.f32.xlu0 %v1761
        %v1763 = vpop.xlane.xlu0 %1762
        %v1764 = vld [vmem:[%s226 + $0x5] sm:$0x3]
        %v1765 = vld [vmem:[%s226 + $0x35] sm:$0x3]
        %v1766 = vld [vmem:[%s226 + $0x65] sm:$0x3]
        %v1767 = vld [vmem:[%s226 + $0x95] sm:$0x3]
        %v1768 = vld [vmem:[%s235 + $0x5] sm:$0x3]
        %v1769 = vld [vmem:[%s235 + $0x35] sm:$0x3]
        %v1770 = vld [vmem:[%s235 + $0x65] sm:$0x3]
        %v1771 = vld [vmem:[%s235 + $0x95] sm:$0x3]
        %v1772 = vmax.f32 %v1764, %v1768
        %v1773 = vmax.f32 %v1765, %v1769
        %v1774 = vmax.f32 %v1766, %v1770
        %v1775 = vmax.f32 %v1767, %v1771
        %v1776 = vsel %vm720, %v1772, -inf
        %v1777 = vrot.slane %v1776, 4
        %v1778 = vmax.f32 %v1776, %v1777
        %v1779 = vrot.slane %v1778, 2
        %v1780 = vmax.f32 %v1778, %v1779
        %v1781 = vrot.slane %v1780, 1
        %v1782 = vmax.f32 %v1780, %v1781
        %v1783 = vsel %vm720, %v1773, -inf
        %v1784 = vrot.slane %v1783, 4
        %v1785 = vmax.f32 %v1783, %v1784
        %v1786 = vrot.slane %v1785, 2
        %v1787 = vmax.f32 %v1785, %v1786
        %v1788 = vrot.slane %v1787, 1
        %v1789 = vmax.f32 %v1787, %v1788
        %v1790 = vsel %vm720, %v1774, -inf
        %v1791 = vrot.slane %v1790, 4
        %v1792 = vmax.f32 %v1790, %v1791
        %v1793 = vrot.slane %v1792, 2
        %v1794 = vmax.f32 %v1792, %v1793
        %v1795 = vrot.slane %v1794, 1
        %v1796 = vmax.f32 %v1794, %v1795
        %v1797 = vsel %vm720, %v1775, -inf
        %v1798 = vrot.slane %v1797, 4
        %v1799 = vmax.f32 %v1797, %v1798
        %v1800 = vrot.slane %v1799, 2
        %v1801 = vmax.f32 %v1799, %v1800
        %v1802 = vrot.slane %v1801, 1
        %v1803 = vmax.f32 %v1801, %v1802
        %v1808 = vsel %vm277, %v1789, %v1782
        %v1809 = vsel %vm279, %v1796, %v1808
        %v1810 = vsel %vm281, %v1803, %v1809
        %v1812 = vsel %vm757, %v1810, -inf
        %1813 = vmax.xlane.f32.xlu0 %v1812
        %v1814 = vpop.xlane.xlu0 %1813
        %v1815 = vmax.f32 %v1814, 0.0
        %v1816 = vsel %vm762, %v1772, -inf
        %v1817 = vrot.slane %v1816, 4
        %v1818 = vmax.f32 %v1816, %v1817
        %v1819 = vrot.slane %v1818, 2
        %v1820 = vmax.f32 %v1818, %v1819
        %v1821 = vrot.slane %v1820, 1
        %v1822 = vmax.f32 %v1820, %v1821
        %v1823 = vsel %vm762, %v1773, -inf
        %v1824 = vrot.slane %v1823, 4
        %v1825 = vmax.f32 %v1823, %v1824
        %v1826 = vrot.slane %v1825, 2
        %v1827 = vmax.f32 %v1825, %v1826
        %v1828 = vrot.slane %v1827, 1
        %v1829 = vmax.f32 %v1827, %v1828
        %v1830 = vsel %vm762, %v1774, -inf
        %v1831 = vrot.slane %v1830, 4
        %v1832 = vmax.f32 %v1830, %v1831
        %v1833 = vrot.slane %v1832, 2
        %v1834 = vmax.f32 %v1832, %v1833
        %v1835 = vrot.slane %v1834, 1
        %v1836 = vmax.f32 %v1834, %v1835
        %v1837 = vsel %vm762, %v1775, -inf
        %v1838 = vrot.slane %v1837, 4
        %v1839 = vmax.f32 %v1837, %v1838
        %v1840 = vrot.slane %v1839, 2
        %v1841 = vmax.f32 %v1839, %v1840
        %v1842 = vrot.slane %v1841, 1
        %v1843 = vmax.f32 %v1841, %v1842
        %v1848 = vsel %vm277, %v1829, %v1822
        %v1849 = vsel %vm279, %v1836, %v1848
        %v1850 = vsel %vm281, %v1843, %v1849
        %v1852 = vsel %vm799, %v1850, -inf
        %1853 = vmax.xlane.f32.xlu0 %v1852
        %v1854 = vpop.xlane.xlu0 %1853
        %v1855 = vmax.f32 %v1854, 0.0
        %v1856 = vsel %vm804, %v1772, -inf
        %v1857 = vrot.slane %v1856, 4
        %v1858 = vmax.f32 %v1856, %v1857
        %v1859 = vrot.slane %v1858, 2
        %v1860 = vmax.f32 %v1858, %v1859
        %v1861 = vrot.slane %v1860, 1
        %v1862 = vmax.f32 %v1860, %v1861
        %v1863 = vsel %vm804, %v1773, -inf
        %v1864 = vrot.slane %v1863, 4
        %v1865 = vmax.f32 %v1863, %v1864
        %v1866 = vrot.slane %v1865, 2
        %v1867 = vmax.f32 %v1865, %v1866
        %v1868 = vrot.slane %v1867, 1
        %v1869 = vmax.f32 %v1867, %v1868
        %v1870 = vsel %vm804, %v1774, -inf
        %v1871 = vrot.slane %v1870, 4
        %v1872 = vmax.f32 %v1870, %v1871
        %v1873 = vrot.slane %v1872, 2
        %v1874 = vmax.f32 %v1872, %v1873
        %v1875 = vrot.slane %v1874, 1
        %v1876 = vmax.f32 %v1874, %v1875
        %v1877 = vsel %vm804, %v1775, -inf
        %v1878 = vrot.slane %v1877, 4
        %v1879 = vmax.f32 %v1877, %v1878
        %v1880 = vrot.slane %v1879, 2
        %v1881 = vmax.f32 %v1879, %v1880
        %v1882 = vrot.slane %v1881, 1
        %v1883 = vmax.f32 %v1881, %v1882
        %v1888 = vsel %vm277, %v1869, %v1862
        %v1889 = vsel %vm279, %v1876, %v1888
        %v1890 = vsel %vm281, %v1883, %v1889
        %v1892 = vsel %vm841, %v1890, -inf
        %1893 = vmax.xlane.f32.xlu0 %v1892
        %v1894 = vpop.xlane.xlu0 %1893
        %v1895 = vmax.f32 %v1894, 0.0
        %v1896 = vsel %vm692, %v761, %v803
        %v1897 = vsel %vm694, %v1896, %v845
        %v1898 = vsel %vm696, %v1897, %v897
        %v1899 = vsel %vm698, %v1898, %v937
        %v1900 = vsel %vm700, %v1899, %v977
        %v1901 = vsel %vm702, %v1900, %v1029
        %v1902 = vsel %vm704, %v1901, %v1069
        %vm1903 = vcmask 64512
        %v1904 = vsel %vm1903, %v1902, %v1109
        %vm1905 = vcmask 72704
        %v1906 = vsel %vm1905, %v1904, %v1161
        %vm1907 = vcmask 80896
        %v1908 = vsel %vm1907, %v1906, %v1201
        %vm1909 = vcmask 89088
        %v1910 = vsel %vm1909, %v1908, %v1241
        %vm1911 = vcmask 97280
        %v1912 = vsel %vm1911, %v1910, %v1292
        %vm1913 = vcmask 105472
        %v1914 = vsel %vm1913, %v1912, %v1331
        %vm1915 = vcmask 113664
        %v1916 = vsel %vm1915, %v1914, %v1370
        %vm1917 = vcmask 121856
        %v1918 = vsel %vm1917, %v1916, %v1422
        %v1919 = vsel %vm692, %v1462, %v1502
        %v1920 = vsel %vm694, %v1919, %v1554
        %v1921 = vsel %vm696, %v1920, %v1594
        %v1922 = vsel %vm698, %v1921, %v1634
        %v1923 = vsel %vm700, %v1922, %v1685
        %v1924 = vsel %vm702, %v1923, %v1724
        %v1925 = vsel %vm704, %v1924, %v1763
        %v1926 = vsel %vm1903, %v1925, %v1815
        %v1927 = vsel %vm1905, %v1926, %v1855
        %v1928 = vsel %vm1907, %v1927, %v1895
        %1930 = vrot.lane.b32.xlu0 %v1928, 16
        %v1931 = vpop.permute.xlu0 %1930
        %vm1933 = vcmask 130048
        %v1934 = vsel %vm1933, %v1918, %v1931
        %vm1935 = vcmask 216064
        %1936 = vst.msk [vmem:[%s183] sm:$0xf] %vm1935, %v1934
        %p1937 = scmp.lt.s32.totalorder %s21, 1
        %s1938 = scalar_select %p1937, %s21, 1
        %s1939 = smul.addr %s1938, 4
        %s1940 = scalar_lea.vmem %s1, %s1939
        %s1941 = sand.u32 %s81, 1
        %s1942 = scalar_lea.sflag [#allocation3], %s1941
        %s1943 = sand.u32 %s81, 1
        %s1944 = smul.addr %s1943, 4
        %s1945 = scalar_lea.vmem [#allocation2], %s1944
        %s1946 = sand.u32 %s107, 1
        %s1947 = scalar_lea.sflag [#allocation5], %s1946
        %s1948 = sand.u32 %s107, 1
        %s1949 = smul.addr %s1948, 4
        %s1950 = scalar_lea.vmem [#allocation4], %s1949
        // Predicated region
        $region25: #{tpu_custom_call.1} parent=23 // pred_check
          %p1951 = pneg %p65
        $region26: #{tpu_custom_call.1} parent=23 // pred_check_branch
          %1953 = sbr.rel (%p1951) target = $region28
        $region27: #{tpu_custom_call.1} parent=23 // pred_region
          _
        $region28: #{tpu_custom_call.1} parent=23 // pred_fallthru
          _
        // Predicated region
        $region29: #{tpu_custom_call.1} parent=23 // pred_check
          %p1954 = pneg %p91
        $region30: #{tpu_custom_call.1} parent=23 // pred_check_branch
          %1956 = sbr.rel (%p1954) target = $region32
        $region31: #{tpu_custom_call.1} parent=23 // pred_region
          %s1958 = ssub.s32 64, 64
          %1959 = vsyncadd %s1942, %s1958
          %s1960 = smul.addr %s21, 64
          %s1961 = scalar_lea.hbm %s2, %s1960
          %s1963 = sshll.u32 %s1945, 4
          %s1964 = int_to_ptr.vmem [resolvable:$true] %s1963
          %1966 = dma.vmem_to_hbm [thread:$0]  %s1964, 64, %s1961, %s1942
        $region32: #{tpu_custom_call.1} parent=23 // pred_fallthru
          _
        // Predicated region
        $region33: #{tpu_custom_call.1} parent=23 // pred_check
          %p1967 = pneg %p117
        $region34: #{tpu_custom_call.1} parent=23 // pred_check_branch
          %1969 = sbr.rel (%p1967) target = $region36
        $region35: #{tpu_custom_call.1} parent=23 // pred_region
          %s1971 = ssub.s32 64, 64
          %1972 = vsyncadd %s1947, %s1971
          %s1973 = smul.addr %s21, 64
          %s1974 = scalar_lea.hbm %s3, %s1973
          %s1976 = sshll.u32 %s1950, 4
          %s1977 = int_to_ptr.vmem [resolvable:$true] %s1976
          %1979 = dma.vmem_to_hbm [thread:$0]  %s1977, 64, %s1974, %s1947
        $region36: #{tpu_custom_call.1} parent=23 // pred_fallthru
          _
      $region24: #{tpu_custom_call.1} parent=5 // pred_fallthru
        _
      %p1980 = scmp.le.s32.totalorder 2, %s16
      // Predicated region
      $region37: #{tpu_custom_call.1} parent=5 // pred_check
        %p1981 = pneg %p1980
      $region38: #{tpu_custom_call.1} parent=5 // pred_check_branch
        %1983 = sbr.rel (%p1981) target = $region40
      $region39: #{tpu_custom_call.1} parent=5 // pred_region
        %s1984 = ssub.s32 %s16, 2
        // Predicated region
        $region41: #{tpu_custom_call.1} parent=39 // pred_check
          %p1985 = pneg %p71
        $region42: #{tpu_custom_call.1} parent=39 // pred_check_branch
          %1987 = sbr.rel (%p1985) target = $region44
        $region43: #{tpu_custom_call.1} parent=39 // pred_region
          %p1988 = scmp.lt.s32.totalorder %s22, 1
          %s1989 = scalar_select %p1988, %s22, 1
          %s1990 = smul.addr %s1989, 4
          %s1991 = scalar_lea.vmem %s1, %s1990
        $region44: #{tpu_custom_call.1} parent=39 // pred_fallthru
          _
        // Predicated region
        $region45: #{tpu_custom_call.1} parent=39 // pred_check
          %p1992 = pneg %p97
        $region46: #{tpu_custom_call.1} parent=39 // pred_check_branch
          %1994 = sbr.rel (%p1992) target = $region48
        $region47: #{tpu_custom_call.1} parent=39 // pred_region
          %s1995 = sand.u32 %s82, 1
          %s1996 = scalar_lea.sflag [#allocation3], %s1995
          %s1997 = sand.u32 %s82, 1
          %s1998 = smul.addr %s1997, 4
          %s1999 = scalar_lea.vmem [#allocation2], %s1998
          %2000 = dma.done %s1996, 64
        $region48: #{tpu_custom_call.1} parent=39 // pred_fallthru
          _
        // Predicated region
        $region49: #{tpu_custom_call.1} parent=39 // pred_check
          %p2001 = pneg %p123
        $region50: #{tpu_custom_call.1} parent=39 // pred_check_branch
          %2003 = sbr.rel (%p2001) target = $region52
        $region51: #{tpu_custom_call.1} parent=39 // pred_region
          %s2004 = sand.u32 %s108, 1
          %s2005 = scalar_lea.sflag [#allocation5], %s2004
          %s2006 = sand.u32 %s108, 1
          %s2007 = smul.addr %s2006, 4
          %s2008 = scalar_lea.vmem [#allocation4], %s2007
          %2009 = dma.done %s2005, 64
        $region52: #{tpu_custom_call.1} parent=39 // pred_fallthru
          _
      $region40: #{tpu_custom_call.1} parent=5 // pred_fallthru
        _
    $region6: #{tpu_custom_call.1} parent=1 // loop_footer
      %s20 = sadd.s32 1, %s16
    $region7: #{tpu_custom_call.1} parent=1 // loop_footer_branch
      %15 = sbr.rel target = $region3
    $region8: #{tpu_custom_call.1} parent=1 // loop_exit
      _
    %2010 = vsyncpa [#allocation3], 1
    %s2011 = scalar_lea.sflag [#allocation3], 1
    %2012 = vsyncpa %s2011, 1
    %2013 = vsyncpa [#allocation5], 1
    %s2014 = scalar_lea.sflag [#allocation5], 1
    %2015 = vsyncpa %s2014, 1

</llo_original>
